<compile_context>
chip_gen: v5e
topology: v5e:2x2
jax: 0.10.0
libtpu: 0.0.40
codegen_flags: <defaults>
</compile_context>

<pallas_src>
import functools

import jax
import jax.numpy as jnp
from jax import lax
from jax.experimental import pallas as pl
from jax.experimental.pallas import tpu as pltpu


# --------------------------------------------------------------------------- #
# Kernel                                                                      #
# --------------------------------------------------------------------------- #
def _upsample_conv_kernel(x_ref, w_ref, b_ref, o_ref):
    # x_ref: (1, 1, Ht+2, Wp+2, Cin)  padded low-res input row tile (NHWC-ish)
    # w_ref: (2, 6*Cin, Ct)           folded weights; dim0 = row phase a,
    #                                 contraction index = (dy*3 + ox)*Cin + ci,
    #                                 lane index = b*Cout + cout (Cout chunk Ct)
    # b_ref: (1, Ct)                  bias tiled over the column phases (f32)
    # o_ref: (1, 2, Ht*Wp, Ct)        dim1 = row phase a; lanes = column phase b
    ht = x_ref.shape[2] - 2
    wp = x_ref.shape[3] - 2
    cin = x_ref.shape[4]

    xt = x_ref[0, 0]                                   # (Ht+2, Wp+2, Cin)
    # Three column-shifted slabs, shared by BOTH row phases (3 sublane shifts
    # per grid step instead of 6).
    slabs = [xt[:, ox:ox + wp, :] for ox in range(3)]  # each (Ht+2, Wp, Cin)
    bias = b_ref[...]                                  # (1, Ct) f32

    for a in range(2):                                 # row phase (static)
        taps = []
        for dy in range(2):                            # row offset within phase
            r0 = a + dy
            for ox in range(3):                        # column offset
                taps.append(slabs[ox][r0:r0 + ht].reshape(ht * wp, cin))
        patch = jnp.concatenate(taps, axis=-1)         # (Ht*Wp, 6*Cin) im2col
        acc = jnp.dot(patch, w_ref[a],                 # single MXU matmul
                      preferred_element_type=jnp.float32)
        o_ref[0, a] = (acc + bias).astype(o_ref.dtype)


# --------------------------------------------------------------------------- #
# Weight folding                                                              #
# --------------------------------------------------------------------------- #
def _fold_weights(weight, dtype):
    """Fold nearest-2x upsample + 3x3 conv into per-row-phase matmul weights.

    Returns (2, 6*Cin, 2*Cout): dim0 = row phase a, contraction index =
    (dy*3 + ox)*Cin + ci, output lane index = b*Cout + cout.
    """
    cout, cin = weight.shape[0], weight.shape[1]
    w_hwio = jnp.transpose(weight, (2, 3, 1, 0)).astype(jnp.float32)  # (u,v,Ci,Co)
    # Row-phase fold M[a, dy, u] and column-phase fold N[b, ox, v].
    m = jnp.array([[[1, 0, 0], [0, 1, 1]],
                   [[1, 1, 0], [0, 0, 1]]], jnp.float32)
    nmat = jnp.array([[[1, 0, 0], [0, 1, 1], [0, 0, 0]],
                      [[0, 0, 0], [1, 1, 0], [0, 0, 1]]], jnp.float32)
    wf = jnp.einsum('adu,bxv,uvio->adxibo', m, nmat, w_hwio)  # (2,2,3,Ci,2,Co)
    return wf.reshape(2, 6 * cin, 2 * cout).astype(dtype)


# --------------------------------------------------------------------------- #
# Tile / VMEM sizing (per TPU generation)                                     #
# --------------------------------------------------------------------------- #
def _vmem_limit_bytes():
    cap = 64 * 1024 * 1024                       # conservative fallback (v7x)
    try:
        cap = int(pltpu.get_tpu_info().vmem_capacity_bytes)
    except Exception:
        pass
    return min(cap - 8 * 1024 * 1024, 100 * 1024 * 1024)


def _pick_cout_tile(c2):
    """Lane chunk of the folded output channel dim 2*Cout."""
    if c2 <= 512:
        return c2
    for ct in (512, 384, 256, 128):
        if c2 % ct == 0:
            return ct
    return c2


def _vmem_need_bytes(ht, wp, cin, ct, in_item, out_item):
    in_tile = (ht + 2) * (wp + 2) * cin * in_item
    w_tile = 2 * 6 * cin * ct * in_item
    out_tile = 2 * ht * wp * ct * out_item
    slabs = 3 * (ht + 2) * wp * cin * in_item
    patch = ht * wp * 6 * cin * in_item
    acc = ht * wp * ct * 4
    # double-buffered pipeline blocks + in-kernel temporaries
    return 2 * (in_tile + w_tile + out_tile) + slabs + patch + acc


def _pick_row_tile(h, wp, cin, ct, in_item, out_item, budget):
    """Largest row tile dividing H (8-aligned when possible) fitting the budget."""
    cands = [d for d in range(h, 0, -1) if h % d == 0 and (d % 8 == 0 or d == h)]
    for d in cands:
        if _vmem_need_bytes(d, wp, cin, ct, in_item, out_item) <= budget:
            return d
    return cands[-1]


# --------------------------------------------------------------------------- #
# Forward wrapper                                                             #
# --------------------------------------------------------------------------- #
@functools.partial(jax.jit, static_argnames=("compute_dtype",))
def upsample_forward(x_nchw, weight, bias, *, compute_dtype=jnp.bfloat16):
    """DDPM UpSample: nearest-2x upsample + Conv2d(3x3, padding=1), NCHW API.

    compute_dtype: operand dtype fed to the MXU (bf16 default fast path);
    accumulation is always f32 and the output dtype follows the input.
    """
    n, cin, h, w = x_nchw.shape
    cout = weight.shape[0]
    c2 = 2 * cout
    in_item = jnp.dtype(compute_dtype).itemsize
    out_item = jnp.dtype(x_nchw.dtype).itemsize

    wp = ((w + 7) // 8) * 8                      # sublane-aligned width
    ct = _pick_cout_tile(c2)
    nct = c2 // ct
    vmem_limit = _vmem_limit_bytes()
    ht = _pick_row_tile(h, wp, cin, ct, in_item, out_item,
                        budget=int(0.8 * vmem_limit))
    t = h // ht

    # ---- low-resolution glue (touches only the small input tensor) ----------
    x_nhwc = jnp.transpose(x_nchw, (0, 2, 3, 1)).astype(compute_dtype)
    # pad: 1 row top/bottom, 1 col left, 1 + (wp - w) cols right (all zeros)
    x_pad = jnp.pad(x_nhwc, ((0, 0), (1, 1), (1, 1 + (wp - w)), (0, 0)))
    # Row tiles carry their own 2-row halo so BlockSpecs never overlap.
    x_tiles = jnp.stack(
        [x_pad[:, i * ht:i * ht + ht + 2] for i in range(t)], axis=1
    )                                                         # (N,T,Ht+2,Wp+2,Ci)

    wfold = _fold_weights(weight, compute_dtype)              # (2, 6*Ci, 2*Co)
    bias2 = jnp.tile(bias.astype(jnp.float32), 2).reshape(1, c2)

    out = pl.pallas_call(
        _upsample_conv_kernel,
        out_shape=jax.ShapeDtypeStruct((n, 2, h * wp, c2), x_nchw.dtype),
        grid_spec=pltpu.PrefetchScalarGridSpec(
            num_scalar_prefetch=0,
            grid=(n, nct, t),                    # (batch, Cout chunk, row tile)
            in_specs=[
                # Input tile changes only with (batch, row tile).
                pl.BlockSpec((1, 1, ht + 2, wp + 2, cin),
                             lambda ni, ci, ti: (ni, ti, 0, 0, 0)),
                # Folded weights: one Cout chunk, resident across all row tiles.
                pl.BlockSpec((2, 6 * cin, ct), lambda ni, ci, ti: (0, 0, ci)),
                pl.BlockSpec((1, ct), lambda ni, ci, ti: (0, ci)),
            ],
            out_specs=pl.BlockSpec((1, 2, ht * wp, ct),
                                   lambda ni, ci, ti: (ni, 0, ti, ci)),
        ),
        compiler_params=pltpu.CompilerParams(
            # All axes write disjoint output blocks -> fully parallel (lets the
            # v7x megacore split batch / Cout chunks / row tiles).
            dimension_semantics=("parallel", "parallel", "parallel"),
            vmem_limit_bytes=vmem_limit,
        ),
    )(x_tiles, wfold, bias2)

    # Free reshapes + ONE transpose back to the module's NCHW layout; the
    # row/column phase de-interleave rides along with it for free.
    out = out.reshape(n, 2, h, wp, 2, cout)              # [n, a, i, j, b, c]
    out = jnp.transpose(out, (0, 5, 2, 1, 3, 4))         # [n, c, i, a, j, b]
    if wp != w:
        out = out[:, :, :, :, :w, :]
    return out.reshape(n, cout, 2 * h, 2 * w)            # rows 2i+a, cols 2j+b


# --------------------------------------------------------------------------- #
# Self-test                                                                   #
# --------------------------------------------------------------------------- #
if __name__ == "__main__":
    N, Cin, Cout, H, W = 2, 4, 8, 16, 16

    key = jax.random.PRNGKey(0)
    kx, kw, kb = jax.random.split(key, 3)

    x = jax.random.normal(kx, (N, Cin, H, W), dtype=jnp.float32)

    # Deterministic Conv2d init (PyTorch-style kaiming-uniform bounds).
    fan_in = Cin * 3 * 3
    bound = 1.0 / (fan_in ** 0.5)
    weight = jax.random.uniform(kw, (Cout, Cin, 3, 3), jnp.float32,
                                minval=-bound, maxval=bound)
    bias = jax.random.uniform(kb, (Cout,), jnp.float32,
                              minval=-bound, maxval=bound)

    # Reference: XLA conv on the nearest-2x upsampled input (f32).
    x_up = jnp.repeat(jnp.repeat(x, 2, axis=2), 2, axis=3)
    ref = lax.conv_general_dilated(
        x_up, weight, window_strides=(1, 1), padding="SAME",
        dimension_numbers=("NCHW", "OIHW", "NCHW")) + bias[None, :, None, None]
    ref = jax.block_until_ready(ref)

    # Bit-accurate path (f32 operands, f32 accumulation) -> tight tolerance.
    out_f32 = jax.block_until_ready(
        upsample_forward(x, weight, bias, compute_dtype=jnp.float32))
    assert out_f32.shape == (N, Cout, 2 * H, 2 * W)
    assert out_f32.dtype == jnp.float32
    err_f32 = float(jnp.max(jnp.abs(out_f32 - ref)))
    assert err_f32 < 1e-4, f"f32 mismatch vs reference: {err_f32}"

    # Default fast path (bf16 operands on the MXU, f32 accumulation).
    out_bf16 = jax.block_until_ready(upsample_forward(x, weight, bias))
    assert out_bf16.shape == (N, Cout, 2 * H, 2 * W)
    assert out_bf16.dtype == jnp.float32
    err_bf16 = float(jnp.max(jnp.abs(out_bf16 - ref)))
    assert err_bf16 < 1e-1, f"bf16 mismatch vs reference: {err_bf16}"

    print("KERNEL_OK")
</pallas_src>

<mosaic_0001>
module attributes {stable_mosaic.version = 11 : i64} {
  func.func @_upsample_conv_kernel(%arg0: i32, %arg1: i32, %arg2: i32, %arg3: memref<1x1x18x18x4xf32, #tpu.memory_space<vmem>>, %arg4: memref<2x24x16xf32, #tpu.memory_space<vmem>>, %arg5: memref<1x16xf32, #tpu.memory_space<vmem>>, %arg6: memref<1x2x256x16xf32, #tpu.memory_space<vmem>>) attributes {dimension_semantics = [#tpu.dimension_semantics<parallel>, #tpu.dimension_semantics<parallel>, #tpu.dimension_semantics<parallel>], iteration_bounds = array<i64: 2, 1, 1>, scalar_prefetch = 0 : i64, scratch_operands = 0 : i64, tpu.core_type = #tpu.core_type<tc>, window_params = [{transform_indices = @transform_0, window_bounds = array<i64: 1, 1, 18, 18, 4>}, {transform_indices = @transform_1, window_bounds = array<i64: 2, 24, 16>}, {transform_indices = @transform_2, window_bounds = array<i64: 1, 16>}, {transform_indices = @transform_3, window_bounds = array<i64: 1, 2, 256, 16>}]} {
    %c0 = arith.constant 0 : index
    %c0_0 = arith.constant 0 : index
    %c0_1 = arith.constant 0 : index
    %c0_2 = arith.constant 0 : index
    %c0_3 = arith.constant 0 : index
    %0 = vector.load %arg3[%c0, %c0_0, %c0_1, %c0_2, %c0_3] : memref<1x1x18x18x4xf32, #tpu.memory_space<vmem>>, vector<1x1x18x18x4xf32>
    %1 = vector.shape_cast %0 : vector<1x1x18x18x4xf32> to vector<18x18x4xf32>
    %2 = vector.extract_strided_slice %1 {offsets = [0, 0, 0], sizes = [18, 16, 4], strides = [1, 1, 1]} : vector<18x18x4xf32> to vector<18x16x4xf32>
    %3 = vector.extract_strided_slice %1 {offsets = [0, 1, 0], sizes = [18, 16, 4], strides = [1, 1, 1]} : vector<18x18x4xf32> to vector<18x16x4xf32>
    %4 = vector.extract_strided_slice %1 {offsets = [0, 2, 0], sizes = [18, 16, 4], strides = [1, 1, 1]} : vector<18x18x4xf32> to vector<18x16x4xf32>
    %c0_4 = arith.constant 0 : index
    %c0_5 = arith.constant 0 : index
    %5 = vector.load %arg5[%c0_4, %c0_5] : memref<1x16xf32, #tpu.memory_space<vmem>>, vector<1x16xf32>
    %6 = vector.extract_strided_slice %2 {offsets = [0, 0, 0], sizes = [16, 16, 4], strides = [1, 1, 1]} : vector<18x16x4xf32> to vector<16x16x4xf32>
    %7 = vector.shape_cast %6 : vector<16x16x4xf32> to vector<256x4xf32>
    %8 = vector.extract_strided_slice %3 {offsets = [0, 0, 0], sizes = [16, 16, 4], strides = [1, 1, 1]} : vector<18x16x4xf32> to vector<16x16x4xf32>
    %9 = vector.shape_cast %8 : vector<16x16x4xf32> to vector<256x4xf32>
    %10 = vector.extract_strided_slice %4 {offsets = [0, 0, 0], sizes = [16, 16, 4], strides = [1, 1, 1]} : vector<18x16x4xf32> to vector<16x16x4xf32>
    %11 = vector.shape_cast %10 : vector<16x16x4xf32> to vector<256x4xf32>
    %12 = vector.extract_strided_slice %2 {offsets = [1, 0, 0], sizes = [16, 16, 4], strides = [1, 1, 1]} : vector<18x16x4xf32> to vector<16x16x4xf32>
    %13 = vector.shape_cast %12 : vector<16x16x4xf32> to vector<256x4xf32>
    %14 = vector.extract_strided_slice %3 {offsets = [1, 0, 0], sizes = [16, 16, 4], strides = [1, 1, 1]} : vector<18x16x4xf32> to vector<16x16x4xf32>
    %15 = vector.shape_cast %14 : vector<16x16x4xf32> to vector<256x4xf32>
    %16 = vector.extract_strided_slice %4 {offsets = [1, 0, 0], sizes = [16, 16, 4], strides = [1, 1, 1]} : vector<18x16x4xf32> to vector<16x16x4xf32>
    %17 = vector.shape_cast %16 : vector<16x16x4xf32> to vector<256x4xf32>
    %18 = tpu.concatenate %7, %9, %11, %13, %15, %17 in 1 : vector<256x4xf32>, vector<256x4xf32>, vector<256x4xf32>, vector<256x4xf32>, vector<256x4xf32>, vector<256x4xf32> -> vector<256x24xf32>
    %c0_6 = arith.constant 0 : index
    %c0_7 = arith.constant 0 : index
    %c0_8 = arith.constant 0 : index
    %19 = vector.load %arg4[%c0_6, %c0_7, %c0_8] : memref<2x24x16xf32, #tpu.memory_space<vmem>>, vector<1x24x16xf32>
    %20 = vector.shape_cast %19 : vector<1x24x16xf32> to vector<24x16xf32>
    %cst = arith.constant dense<0.000000e+00> : vector<256x16xf32>
    %21 = tpu.matmul %18, %20, %cst {dimension_numbers = #tpu.dot_dimension_numbers<[1], [0], [0], [1], [0, 0, 1, 1], [], []>} : vector<256x24xf32>, vector<24x16xf32>, vector<256x16xf32> -> vector<256x16xf32>
    %22 = vector.broadcast %5 : vector<1x16xf32> to vector<256x16xf32>
    %23 = arith.addf %21, %22 : vector<256x16xf32>
    %c0_9 = arith.constant 0 : index
    %c0_10 = arith.constant 0 : index
    %c0_11 = arith.constant 0 : index
    %c0_12 = arith.constant 0 : index
    %24 = vector.load %arg6[%c0_9, %c0_10, %c0_11, %c0_12] : memref<1x2x256x16xf32, #tpu.memory_space<vmem>>, vector<1x1x256x16xf32>
    %25 = vector.shape_cast %24 : vector<1x1x256x16xf32> to vector<256x16xf32>
    %26 = vector.shape_cast %23 : vector<256x16xf32> to vector<1x1x256x16xf32>
    tpu.vector_store %arg6[%c0_9, %c0_10, %c0_11, %c0_12], %26 {strides = array<i32>} : memref<1x2x256x16xf32, #tpu.memory_space<vmem>>, vector<1x1x256x16xf32>,
    %27 = vector.extract_strided_slice %2 {offsets = [1, 0, 0], sizes = [16, 16, 4], strides = [1, 1, 1]} : vector<18x16x4xf32> to vector<16x16x4xf32>
    %28 = vector.shape_cast %27 : vector<16x16x4xf32> to vector<256x4xf32>
    %29 = vector.extract_strided_slice %3 {offsets = [1, 0, 0], sizes = [16, 16, 4], strides = [1, 1, 1]} : vector<18x16x4xf32> to vector<16x16x4xf32>
    %30 = vector.shape_cast %29 : vector<16x16x4xf32> to vector<256x4xf32>
    %31 = vector.extract_strided_slice %4 {offsets = [1, 0, 0], sizes = [16, 16, 4], strides = [1, 1, 1]} : vector<18x16x4xf32> to vector<16x16x4xf32>
    %32 = vector.shape_cast %31 : vector<16x16x4xf32> to vector<256x4xf32>
    %33 = vector.extract_strided_slice %2 {offsets = [2, 0, 0], sizes = [16, 16, 4], strides = [1, 1, 1]} : vector<18x16x4xf32> to vector<16x16x4xf32>
    %34 = vector.shape_cast %33 : vector<16x16x4xf32> to vector<256x4xf32>
    %35 = vector.extract_strided_slice %3 {offsets = [2, 0, 0], sizes = [16, 16, 4], strides = [1, 1, 1]} : vector<18x16x4xf32> to vector<16x16x4xf32>
    %36 = vector.shape_cast %35 : vector<16x16x4xf32> to vector<256x4xf32>
    %37 = vector.extract_strided_slice %4 {offsets = [2, 0, 0], sizes = [16, 16, 4], strides = [1, 1, 1]} : vector<18x16x4xf32> to vector<16x16x4xf32>
    %38 = vector.shape_cast %37 : vector<16x16x4xf32> to vector<256x4xf32>
    %39 = tpu.concatenate %28, %30, %32, %34, %36, %38 in 1 : vector<256x4xf32>, vector<256x4xf32>, vector<256x4xf32>, vector<256x4xf32>, vector<256x4xf32>, vector<256x4xf32> -> vector<256x24xf32>
    %c1 = arith.constant 1 : index
    %c0_13 = arith.constant 0 : index
    %c0_14 = arith.constant 0 : index
    %40 = vector.load %arg4[%c1, %c0_13, %c0_14] : memref<2x24x16xf32, #tpu.memory_space<vmem>>, vector<1x24x16xf32>
    %41 = vector.shape_cast %40 : vector<1x24x16xf32> to vector<24x16xf32>
    %cst_15 = arith.constant dense<0.000000e+00> : vector<256x16xf32>
    %42 = tpu.matmul %39, %41, %cst_15 {dimension_numbers = #tpu.dot_dimension_numbers<[1], [0], [0], [1], [0, 0, 1, 1], [], []>} : vector<256x24xf32>, vector<24x16xf32>, vector<256x16xf32> -> vector<256x16xf32>
    %43 = vector.broadcast %5 : vector<1x16xf32> to vector<256x16xf32>
    %44 = arith.addf %42, %43 : vector<256x16xf32>
    %c0_16 = arith.constant 0 : index
    %c1_17 = arith.constant 1 : index
    %c0_18 = arith.constant 0 : index
    %c0_19 = arith.constant 0 : index
    %45 = vector.load %arg6[%c0_16, %c1_17, %c0_18, %c0_19] : memref<1x2x256x16xf32, #tpu.memory_space<vmem>>, vector<1x1x256x16xf32>
    %46 = vector.shape_cast %45 : vector<1x1x256x16xf32> to vector<256x16xf32>
    %47 = vector.shape_cast %44 : vector<256x16xf32> to vector<1x1x256x16xf32>
    tpu.vector_store %arg6[%c0_16, %c1_17, %c0_18, %c0_19], %47 {strides = array<i32>} : memref<1x2x256x16xf32, #tpu.memory_space<vmem>>, vector<1x1x256x16xf32>,
    return
  }
  func.func @transform_0(%arg0: i32, %arg1: i32, %arg2: i32) -> (i32, i32, i32, i32, i32) {
    %c0_i32 = arith.constant 0 : i32
    %c0_i32_0 = arith.constant 0 : i32
    %c0_i32_1 = arith.constant 0 : i32
    %c0_i32_2 = arith.constant 0 : i32
    return %arg0, %arg2, %c0_i32, %c0_i32_0, %c0_i32_1 : i32, i32, i32, i32, i32
  }
  func.func @transform_1(%arg0: i32, %arg1: i32, %arg2: i32) -> (i32, i32, i32) {
    %c0_i32 = arith.constant 0 : i32
    %c0_i32_0 = arith.constant 0 : i32
    %c0_i32_1 = arith.constant 0 : i32
    return %c0_i32, %c0_i32_0, %arg1 : i32, i32, i32
  }
  func.func @transform_2(%arg0: i32, %arg1: i32, %arg2: i32) -> (i32, i32) {
    %c0_i32 = arith.constant 0 : i32
    %c0_i32_0 = arith.constant 0 : i32
    return %c0_i32, %arg1 : i32, i32
  }
  func.func @transform_3(%arg0: i32, %arg1: i32, %arg2: i32) -> (i32, i32, i32, i32) {
    %c0_i32 = arith.constant 0 : i32
    %c0_i32_0 = arith.constant 0 : i32
    return %arg0, %c0_i32, %arg2, %arg1 : i32, i32, i32, i32
  }
}

</mosaic_0001>

<llo_original>
// kernel: tile.9
$region0: #{tile.9}
  %s0 = inlined_call_operand.vmem [shape: f32[2,8], index: 0, kind: input, shape index: {}]
  %s1 = inlined_call_operand.vmem [shape: f32[1,16], index: 1, kind: output, shape index: {}]
  $region1: #{tile.9} parent=0
    #allocation0 [shape = 'u8[4096]{0}', space=vmem, size = 0x1000, scoped, tag = 'scoped mem for output reshape']
    #allocation1 [shape = 'u8[4096]{0}', space=vmem, size = 0x1000, scoped, tag = 'scoped mem for input reshape']
    %s3 = ssub.s32 4, 1
    %v4 = vld [vmem:[%s0] sm:%s3]
    %5 = vst [vmem:[#allocation1] sm:%s3] %v4
    %v6 = vld [vmem:[#allocation1] sm:$0x1]
    %vm7 = vcmask 64512
    %8 = vst.msk [vmem:[#allocation0] sm:$0x1] %vm7, %v6
    %s9 = scalar_lea.vmem [#allocation1], 1
    %v10 = vld [vmem:[%s9] sm:$0x1]
    %11 = vrot.lane.b32.xlu0 %v10, 8
    %v12 = vpop.permute.xlu0 %11
    %vm13 = vcmask 130112
    %14 = vst.msk [vmem:[#allocation0] sm:$0x1] %vm13, %v12
    %s16 = ssub.s32 2, 1
    %v17 = vld [vmem:[#allocation0] sm:%s16]
    %s19 = ssub.s32 2, 1
    %20 = vst [vmem:[%s1] sm:%s19] %v17

// kernel: tile.8
$region0: #{tile.8}
  #allocation0 [shape = 's32[1]{0}', space=sflag, size = 0x4, scoped, tag = 'scoped memory for tile.8']
  %s0 = inlined_call_operand.vmem [shape: f32[8], index: 0, kind: input, shape index: {}]
  %s1 = inlined_call_operand.vmem [shape: f32[2,8], index: 1, kind: output, shape index: {}]
  // Predicated region
  $region2: #{tile.8} parent=0 // pred_check
    _
  $region3: #{tile.8} parent=0 // pred_check_branch
    %3 = sbr.rel (0) target = $region5
  $region4: #{tile.8} parent=0 // pred_region
    _
  $region5: #{tile.8} parent=0 // pred_fallthru
    _
  %v4 = vld [vmem:[%s0] ss:$0 sm:$0xff]
  %5 = vst [vmem:[%s1] sm:$0x3] %v4

// kernel: upsample_forward.1
$region0: #{upsample_forward.1}
  #allocation0 [shape = 'u32[]', space=smem, size = 0x4, offset = 0x4, fixed_abs, tag = 'smem constant byte address 0x4 - core index']
  #allocation1 [shape = 'u32[72,128]{1,0:T(1,128)}', space=vmem, size = 0x9000, scoped, tag = 'internal scratch']
  %s0 = inlined_call_operand.vmem [shape: f32[2,1,18,18,4], index: 0, kind: input, shape index: {}]
  %s1 = inlined_call_operand.vmem [shape: f32[2,24,16], index: 1, kind: input, shape index: {}]
  %s2 = inlined_call_operand.vmem [shape: f32[1,16], index: 2, kind: input, shape index: {}]
  %s3 = inlined_call_operand.vmem [shape: f32[2,2,256,16], index: 3, kind: output, shape index: {}]
  %s4 = sld [smem:[#allocation0]]
  $region45: #{upsample_forward.1} parent=0
    _
  %s6 = ssub.s32 1, %s4
  %s7 = scalar_select 0, %s6, %s4
  loop: start=0, step=1, limit=4
  $region2: #{upsample_forward.1} parent=0 // loop_pre_header
    _
  $region3: #{upsample_forward.1} parent=0 // loop_header
    %s9 = sphi 0, %s13
    %p10 = scmp.ge.s32.totalorder %s9, 4
    %s16 = sphi 0, %s35
    %s17 = sphi 0, %s31
    %s18 = sphi 0, %s27
    %s19 = sphi 0, %s16
    %s20 = sphi 0, %s17
    %s21 = sphi 0, %s18
    %s22 = sphi 0, %s19
    %s23 = sphi 0, %s20
    %s24 = sphi 0, %s21
    %s40 = sphi 0, %s42
    %s43 = sphi 0, %s40
    %s44 = sphi 0, %s43
    %s60 = sphi 0, %s44
    %s66 = sphi 0, %s68
    %s69 = sphi 0, %s66
    %s70 = sphi 0, %s69
    %s86 = sphi 0, %s70
    %s92 = sphi 0, %s94
    %s95 = sphi 0, %s92
    %s96 = sphi 0, %s95
    %s112 = sphi 0, %s96
    %s122 = sphi 0, %s124
    %s125 = sphi 0, %s122
    %s126 = sphi 0, %s125
    %s142 = sphi 0, %s126
  $region4: #{upsample_forward.1} parent=0 // loop_header_branch
    %12 = sbr.rel (%p10) target = $region8
  $region5: #{upsample_forward.1} parent=0 // loop_body
    %s14 = ssub.s32 %s9, 1
    %s15 = ssub.s32 %s9, 2
    %s25 = sadd.s32 1, %s18
    %p26 = scmp.ge.s32.totalorder %s25, 1
    %s27 = scalar_select %p26, 0, %s25
    %s28 = sadd.s32 1, %s17
    %s29 = scalar_select %p26, %s28, %s17
    %p30 = scmp.ge.s32.totalorder %s29, 1
    %s31 = scalar_select %p30, 0, %s29
    %s32 = sadd.s32 1, %s16
    %s33 = scalar_select %p30, %s32, %s16
    %p34 = scmp.ge.s32.totalorder %s33, 2
    %s35 = scalar_select %p34, 0, %s33
    %s36 = ssub.s32 %s16, %s35
    %s37 = ssub.s32 %s18, %s27
    %s38 = sor.u32 %s36, %s37
    %p39 = scmp.eq.s32.totalorder %s38, 0
    %s41 = sadd.s32 %s40, 1
    %s42 = scalar_select %p39, %s40, %s41
    %p45 = pneg %p39
    %p46 = scmp.eq.s32.totalorder %s9, 1
    %p47 = por %p45, %p46
    %p48 = scmp.ne.s32.totalorder %s40, %s43
    %p49 = scmp.eq.s32.totalorder %s9, 0
    %p50 = por %p48, %p49
    %p51 = scmp.ne.s32.totalorder %s40, %s43
    %p52 = scmp.eq.s32.totalorder %s14, 1
    %p53 = por %p51, %p52
    %p54 = scmp.ne.s32.totalorder %s43, %s44
    %p55 = scmp.eq.s32.totalorder %s14, 0
    %p56 = por %p54, %p55
    %p57 = scmp.ne.s32.totalorder %s43, %s44
    %p58 = scmp.eq.s32.totalorder %s15, 1
    %p59 = por %p57, %p58
    %p61 = scmp.ne.s32.totalorder %s44, %s60
    %p62 = scmp.eq.s32.totalorder %s15, 0
    %p63 = por %p61, %p62
    %s64 = ssub.s32 %s17, %s31
    %p65 = scmp.eq.s32.totalorder %s64, 0
    %s67 = sadd.s32 %s66, 1
    %s68 = scalar_select %p65, %s66, %s67
    %p71 = pneg %p65
    %p72 = scmp.eq.s32.totalorder %s9, 1
    %p73 = por %p71, %p72
    %p74 = scmp.ne.s32.totalorder %s66, %s69
    %p75 = scmp.eq.s32.totalorder %s9, 0
    %p76 = por %p74, %p75
    %p77 = scmp.ne.s32.totalorder %s66, %s69
    %p78 = scmp.eq.s32.totalorder %s14, 1
    %p79 = por %p77, %p78
    %p80 = scmp.ne.s32.totalorder %s69, %s70
    %p81 = scmp.eq.s32.totalorder %s14, 0
    %p82 = por %p80, %p81
    %p83 = scmp.ne.s32.totalorder %s69, %s70
    %p84 = scmp.eq.s32.totalorder %s15, 1
    %p85 = por %p83, %p84
    %p87 = scmp.ne.s32.totalorder %s70, %s86
    %p88 = scmp.eq.s32.totalorder %s15, 0
    %p89 = por %p87, %p88
    %s90 = ssub.s32 %s17, %s31
    %p91 = scmp.eq.s32.totalorder %s90, 0
    %s93 = sadd.s32 %s92, 1
    %s94 = scalar_select %p91, %s92, %s93
    %p97 = pneg %p91
    %p98 = scmp.eq.s32.totalorder %s9, 1
    %p99 = por %p97, %p98
    %p100 = scmp.ne.s32.totalorder %s92, %s95
    %p101 = scmp.eq.s32.totalorder %s9, 0
    %p102 = por %p100, %p101
    %p103 = scmp.ne.s32.totalorder %s92, %s95
    %p104 = scmp.eq.s32.totalorder %s14, 1
    %p105 = por %p103, %p104
    %p106 = scmp.ne.s32.totalorder %s95, %s96
    %p107 = scmp.eq.s32.totalorder %s14, 0
    %p108 = por %p106, %p107
    %p109 = scmp.ne.s32.totalorder %s95, %s96
    %p110 = scmp.eq.s32.totalorder %s15, 1
    %p111 = por %p109, %p110
    %p113 = scmp.ne.s32.totalorder %s96, %s112
    %p114 = scmp.eq.s32.totalorder %s15, 0
    %p115 = por %p113, %p114
    %s116 = ssub.s32 %s16, %s35
    %s117 = ssub.s32 %s18, %s27
    %s118 = sor.u32 %s116, %s117
    %s119 = ssub.s32 %s17, %s31
    %s120 = sor.u32 %s118, %s119
    %p121 = scmp.eq.s32.totalorder %s120, 0
    %s123 = sadd.s32 %s122, 1
    %s124 = scalar_select %p121, %s122, %s123
    %p127 = pneg %p121
    %p128 = scmp.eq.s32.totalorder %s9, 1
    %p129 = por %p127, %p128
    %p130 = scmp.ne.s32.totalorder %s122, %s125
    %p131 = scmp.eq.s32.totalorder %s9, 0
    %p132 = por %p130, %p131
    %p133 = scmp.ne.s32.totalorder %s122, %s125
    %p134 = scmp.eq.s32.totalorder %s14, 1
    %p135 = por %p133, %p134
    %p136 = scmp.ne.s32.totalorder %s125, %s126
    %p137 = scmp.eq.s32.totalorder %s14, 0
    %p138 = por %p136, %p137
    %p139 = scmp.ne.s32.totalorder %s125, %s126
    %p140 = scmp.eq.s32.totalorder %s15, 1
    %p141 = por %p139, %p140
    %p143 = scmp.ne.s32.totalorder %s126, %s142
    %p144 = scmp.eq.s32.totalorder %s15, 0
    %p145 = por %p143, %p144
    %p146 = scmp.le.s32.totalorder 1, %s9
    %p147 = scmp.lt.s32.totalorder %s9, 3
    %p148 = pnand %p146, %p147
    %p149 = pneg %p148
    // Predicated region
    $region9: #{upsample_forward.1} parent=5 // pred_check
      _
    $region10: #{upsample_forward.1} parent=5 // pred_check_branch
      %151 = sbr.rel (%p148) target = $region12
    $region11: #{upsample_forward.1} parent=5 // pred_region
      %s152 = ssub.s32 %s9, 1
      // Predicated region
      $region13: #{upsample_forward.1} parent=11 // pred_check
        %p153 = pneg %p82
      $region14: #{upsample_forward.1} parent=11 // pred_check_branch
        %155 = sbr.rel (%p153) target = $region16
      $region15: #{upsample_forward.1} parent=11 // pred_region
        %p156 = scmp.lt.s32.totalorder %s20, 0
        %s157 = scalar_select %p156, %s20, 0
        %s158 = smul.addr %s157, 8
        %s159 = scalar_lea.vmem %s1, %s158
      $region16: #{upsample_forward.1} parent=11 // pred_fallthru
        _
      // Predicated region
      $region17: #{upsample_forward.1} parent=11 // pred_check
        %p160 = pneg %p108
      $region18: #{upsample_forward.1} parent=11 // pred_check_branch
        %162 = sbr.rel (%p160) target = $region20
      $region19: #{upsample_forward.1} parent=11 // pred_region
        %p163 = scmp.lt.s32.totalorder %s20, 0
        %s164 = scalar_select %p163, %s20, 0
        %s165 = scalar_lea.vmem %s2, %s164
      $region20: #{upsample_forward.1} parent=11 // pred_fallthru
        _
    $region12: #{upsample_forward.1} parent=5 // pred_fallthru
      _
    %p166 = scmp.lt.s32.totalorder %s9, 2
    // Predicated region
    $region21: #{upsample_forward.1} parent=5 // pred_check
      %p167 = pneg %p166
    $region22: #{upsample_forward.1} parent=5 // pred_check_branch
      %169 = sbr.rel (%p167) target = $region24
    $region23: #{upsample_forward.1} parent=5 // pred_region
      // Predicated region
      $region25: #{upsample_forward.1} parent=23 // pred_check
        %p170 = pneg %p50
      $region26: #{upsample_forward.1} parent=23 // pred_check_branch
        %172 = sbr.rel (%p170) target = $region28
      $region27: #{upsample_forward.1} parent=23 // pred_region
        %p173 = scmp.lt.s32.totalorder %s16, 1
        %s174 = scalar_select %p173, %s16, 1
        %p175 = scmp.lt.s32.totalorder %s18, 0
        %s176 = scalar_select %p175, %s18, 0
        %s177 = smul.addr %s176, 54
        %s178 = smul.addr %s174, 54
        %s179 = sadd.s32 %s177, %s178
        %s180 = smul.addr %s179, 8
        %s181 = scalar_lea.vmem %s0, %s180
      $region28: #{upsample_forward.1} parent=23 // pred_fallthru
        _
    $region24: #{upsample_forward.1} parent=5 // pred_fallthru
      _
    %p182 = scmp.le.s32.totalorder 1, %s9
    %p183 = scmp.lt.s32.totalorder %s9, 3
    %p184 = pnand %p182, %p183
    %p185 = pneg %p184
    // Predicated region
    $region29: #{upsample_forward.1} parent=5 // pred_check
      _
    $region30: #{upsample_forward.1} parent=5 // pred_check_branch
      %187 = sbr.rel (%p184) target = $region32
    $region31: #{upsample_forward.1} parent=5 // pred_region
      %s188 = ssub.s32 %s9, 1
      %p189 = scmp.lt.s32.totalorder %s19, 1
      %s190 = scalar_select %p189, %s19, 1
      %p191 = scmp.lt.s32.totalorder %s21, 0
      %s192 = scalar_select %p191, %s21, 0
      %s193 = smul.addr %s192, 54
      %s194 = smul.addr %s190, 54
      %s195 = sadd.s32 %s193, %s194
      %s196 = smul.addr %s195, 8
      %s197 = scalar_lea.vmem %s0, %s196
      %p198 = pneg %p56
      %p199 = pneg %p53
      %p200 = scmp.lt.s32.totalorder %s20, 0
      %s201 = scalar_select %p200, %s20, 0
      %s202 = smul.addr %s201, 8
      %s203 = scalar_lea.vmem %s1, %s202
      %p204 = pneg %p82
      %p205 = pneg %p79
      %p206 = scmp.lt.s32.totalorder %s20, 0
      %s207 = scalar_select %p206, %s20, 0
      %s208 = scalar_lea.vmem %s2, %s207
      %p209 = pneg %p108
      %p210 = pneg %p105
      %p211 = pneg %p138
      %p212 = pneg %p135
      %s213 = smul.u32 32, %s21
      %p214 = scmp.lt.s32.totalorder %s19, 1
      %s215 = scalar_select %p214, %s19, 1
      %p216 = scmp.lt.s32.totalorder %s213, 31
      %s217 = scalar_select %p216, %s213, 31
      %p218 = scmp.lt.s32.totalorder %s20, 0
      %s219 = scalar_select %p218, %s20, 0
      %s220 = sadd.s32 %s219, %s217
      %s221 = smul.addr %s215, 64
      %s222 = sadd.s32 %s220, %s221
      %s223 = smul.addr %s222, 8
      %s224 = scalar_lea.vmem %s3, %s223
      %p225 = scmp.lt.s32.totalorder %s19, 1
      %s226 = scalar_select %p225, %s19, 1
      %p227 = scmp.lt.s32.totalorder %s21, 0
      %s228 = scalar_select %p227, %s21, 0
      %s229 = smul.addr %s228, 54
      %s230 = smul.addr %s226, 54
      %s231 = sadd.s32 %s229, %s230
      %s232 = smul.addr %s231, 8
      %s233 = scalar_lea.vmem %s0, %s232
      %p234 = scmp.lt.s32.totalorder %s20, 0
      %s235 = scalar_select %p234, %s20, 0
      %s236 = smul.addr %s235, 8
      %s237 = scalar_lea.vmem %s1, %s236
      %p238 = scmp.lt.s32.totalorder %s20, 0
      %s239 = scalar_select %p238, %s20, 0
      %s240 = scalar_lea.vmem %s2, %s239
      %s241 = smul.u32 32, %s21
      %p242 = scmp.lt.s32.totalorder %s19, 1
      %s243 = scalar_select %p242, %s19, 1
      %p244 = scmp.lt.s32.totalorder %s241, 31
      %s245 = scalar_select %p244, %s241, 31
      %p246 = scmp.lt.s32.totalorder %s20, 0
      %s247 = scalar_select %p246, %s20, 0
      %s248 = sadd.s32 %s247, %s245
      %s249 = smul.addr %s243, 64
      %s250 = sadd.s32 %s248, %s249
      %s251 = smul.addr %s250, 8
      %s252 = scalar_lea.vmem %s3, %s251
      %s253 = smul.u32 32, %s21
      %v254 = vld [vmem:[%s233] sm:$0xff]
      %v255 = vld [vmem:[%s233 + $0x8] sm:$0xff]
      %v256 = vld [vmem:[%s233 + $0x10] sm:$0x3]
      %v257 = vld [vmem:[%s233 + $0x18] sm:$0xff]
      %v258 = vld [vmem:[%s233 + $0x20] sm:$0xff]
      %v259 = vld [vmem:[%s233 + $0x28] sm:$0x3]
      %v260 = vld [vmem:[%s233 + $0x30] sm:$0xff]
      %v261 = vld [vmem:[%s233 + $0x38] sm:$0xff]
      %v262 = vld [vmem:[%s233 + $0x40] sm:$0x3]
      %v263 = vld [vmem:[%s233 + $0x48] sm:$0xff]
      %v264 = vld [vmem:[%s233 + $0x50] sm:$0xff]
      %v265 = vld [vmem:[%s233 + $0x58] sm:$0x3]
      %v266 = vld [vmem:[%s233 + $0x60] sm:$0xff]
      %v267 = vld [vmem:[%s233 + $0x68] sm:$0xff]
      %v268 = vld [vmem:[%s233 + $0x70] sm:$0x3]
      %v269 = vld [vmem:[%s233 + $0x78] sm:$0xff]
      %v270 = vld [vmem:[%s233 + $0x80] sm:$0xff]
      %v271 = vld [vmem:[%s233 + $0x88] sm:$0x3]
      %v272 = vld [vmem:[%s233 + $0x90] sm:$0xff]
      %v273 = vld [vmem:[%s233 + $0x98] sm:$0xff]
      %v274 = vld [vmem:[%s233 + $0xa0] sm:$0x3]
      %v275 = vld [vmem:[%s233 + $0xa8] sm:$0xff]
      %v276 = vld [vmem:[%s233 + $0xb0] sm:$0xff]
      %v277 = vld [vmem:[%s233 + $0xb8] sm:$0x3]
      %v278 = vld [vmem:[%s233 + $0xc0] sm:$0xff]
      %v279 = vld [vmem:[%s233 + $0xc8] sm:$0xff]
      %v280 = vld [vmem:[%s233 + $0xd0] sm:$0x3]
      %v281 = vld [vmem:[%s233 + $0xd8] sm:$0xff]
      %v282 = vld [vmem:[%s233 + $0xe0] sm:$0xff]
      %v283 = vld [vmem:[%s233 + $0xe8] sm:$0x3]
      %v284 = vld [vmem:[%s233 + $0xf0] sm:$0xff]
      %v285 = vld [vmem:[%s233 + $0xf8] sm:$0xff]
      %v286 = vld [vmem:[%s233 + $0x100] sm:$0x3]
      %v287 = vld [vmem:[%s233 + $0x108] sm:$0xff]
      %v288 = vld [vmem:[%s233 + $0x110] sm:$0xff]
      %v289 = vld [vmem:[%s233 + $0x118] sm:$0x3]
      %v290 = vld [vmem:[%s233 + $0x120] sm:$0xff]
      %v291 = vld [vmem:[%s233 + $0x128] sm:$0xff]
      %v292 = vld [vmem:[%s233 + $0x130] sm:$0x3]
      %v293 = vld [vmem:[%s233 + $0x138] sm:$0xff]
      %v294 = vld [vmem:[%s233 + $0x140] sm:$0xff]
      %v295 = vld [vmem:[%s233 + $0x148] sm:$0x3]
      %v296 = vld [vmem:[%s233 + $0x150] sm:$0xff]
      %v297 = vld [vmem:[%s233 + $0x158] sm:$0xff]
      %v298 = vld [vmem:[%s233 + $0x160] sm:$0x3]
      %v299 = vld [vmem:[%s233 + $0x168] sm:$0xff]
      %v300 = vld [vmem:[%s233 + $0x170] sm:$0xff]
      %v301 = vld [vmem:[%s233 + $0x178] sm:$0x3]
      %v302 = vld [vmem:[%s233 + $0x180] sm:$0xff]
      %v303 = vld [vmem:[%s233 + $0x188] sm:$0xff]
      %v304 = vld [vmem:[%s233 + $0x190] sm:$0x3]
      %v305 = vld [vmem:[%s233 + $0x198] sm:$0xff]
      %v306 = vld [vmem:[%s233 + $0x1a0] sm:$0xff]
      %v307 = vld [vmem:[%s233 + $0x1a8] sm:$0x3]
      %v308 = vld [vmem:[%s240] sm:$0x1]
      %vm357 = vcmask 1046528
      %v358 = vrot.slane %v254, 1
      %v359 = vrot.slane %v255, 1
      %v360 = vsel %vm357, %v358, %v359
      %v361 = vrot.slane %v256, 1
      %v362 = vsel %vm357, %v359, %v361
      %v363 = vrot.slane %v257, 1
      %v364 = vrot.slane %v258, 1
      %v365 = vsel %vm357, %v363, %v364
      %v366 = vrot.slane %v259, 1
      %v367 = vsel %vm357, %v364, %v366
      %v368 = vrot.slane %v260, 1
      %v369 = vrot.slane %v261, 1
      %v370 = vsel %vm357, %v368, %v369
      %v371 = vrot.slane %v262, 1
      %v372 = vsel %vm357, %v369, %v371
      %v373 = vrot.slane %v263, 1
      %v374 = vrot.slane %v264, 1
      %v375 = vsel %vm357, %v373, %v374
      %v376 = vrot.slane %v265, 1
      %v377 = vsel %vm357, %v374, %v376
      %v378 = vrot.slane %v266, 1
      %v379 = vrot.slane %v267, 1
      %v380 = vsel %vm357, %v378, %v379
      %v381 = vrot.slane %v268, 1
      %v382 = vsel %vm357, %v379, %v381
      %v383 = vrot.slane %v269, 1
      %v384 = vrot.slane %v270, 1
      %v385 = vsel %vm357, %v383, %v384
      %v386 = vrot.slane %v271, 1
      %v387 = vsel %vm357, %v384, %v386
      %v388 = vrot.slane %v272, 1
      %v389 = vrot.slane %v273, 1
      %v390 = vsel %vm357, %v388, %v389
      %v391 = vrot.slane %v274, 1
      %v392 = vsel %vm357, %v389, %v391
      %v393 = vrot.slane %v275, 1
      %v394 = vrot.slane %v276, 1
      %v395 = vsel %vm357, %v393, %v394
      %v396 = vrot.slane %v277, 1
      %v397 = vsel %vm357, %v394, %v396
      %v398 = vrot.slane %v278, 1
      %v399 = vrot.slane %v279, 1
      %v400 = vsel %vm357, %v398, %v399
      %v401 = vrot.slane %v280, 1
      %v402 = vsel %vm357, %v399, %v401
      %v403 = vrot.slane %v281, 1
      %v404 = vrot.slane %v282, 1
      %v405 = vsel %vm357, %v403, %v404
      %v406 = vrot.slane %v283, 1
      %v407 = vsel %vm357, %v404, %v406
      %v408 = vrot.slane %v284, 1
      %v409 = vrot.slane %v285, 1
      %v410 = vsel %vm357, %v408, %v409
      %v411 = vrot.slane %v286, 1
      %v412 = vsel %vm357, %v409, %v411
      %v413 = vrot.slane %v287, 1
      %v414 = vrot.slane %v288, 1
      %v415 = vsel %vm357, %v413, %v414
      %v416 = vrot.slane %v289, 1
      %v417 = vsel %vm357, %v414, %v416
      %v418 = vrot.slane %v290, 1
      %v419 = vrot.slane %v291, 1
      %v420 = vsel %vm357, %v418, %v419
      %v421 = vrot.slane %v292, 1
      %v422 = vsel %vm357, %v419, %v421
      %v423 = vrot.slane %v293, 1
      %v424 = vrot.slane %v294, 1
      %v425 = vsel %vm357, %v423, %v424
      %v426 = vrot.slane %v295, 1
      %v427 = vsel %vm357, %v424, %v426
      %v428 = vrot.slane %v296, 1
      %v429 = vrot.slane %v297, 1
      %v430 = vsel %vm357, %v428, %v429
      %v431 = vrot.slane %v298, 1
      %v432 = vsel %vm357, %v429, %v431
      %v433 = vrot.slane %v299, 1
      %v434 = vrot.slane %v300, 1
      %v435 = vsel %vm357, %v433, %v434
      %v436 = vrot.slane %v301, 1
      %v437 = vsel %vm357, %v434, %v436
      %vm438 = vcmask 1045504
      %v439 = vrot.slane %v254, 2
      %v440 = vrot.slane %v255, 2
      %v441 = vsel %vm438, %v439, %v440
      %v442 = vrot.slane %v256, 2
      %v443 = vsel %vm438, %v440, %v442
      %v444 = vrot.slane %v257, 2
      %v445 = vrot.slane %v258, 2
      %v446 = vsel %vm438, %v444, %v445
      %v447 = vrot.slane %v259, 2
      %v448 = vsel %vm438, %v445, %v447
      %v449 = vrot.slane %v260, 2
      %v450 = vrot.slane %v261, 2
      %v451 = vsel %vm438, %v449, %v450
      %v452 = vrot.slane %v262, 2
      %v453 = vsel %vm438, %v450, %v452
      %v454 = vrot.slane %v263, 2
      %v455 = vrot.slane %v264, 2
      %v456 = vsel %vm438, %v454, %v455
      %v457 = vrot.slane %v265, 2
      %v458 = vsel %vm438, %v455, %v457
      %v459 = vrot.slane %v266, 2
      %v460 = vrot.slane %v267, 2
      %v461 = vsel %vm438, %v459, %v460
      %v462 = vrot.slane %v268, 2
      %v463 = vsel %vm438, %v460, %v462
      %v464 = vrot.slane %v269, 2
      %v465 = vrot.slane %v270, 2
      %v466 = vsel %vm438, %v464, %v465
      %v467 = vrot.slane %v271, 2
      %v468 = vsel %vm438, %v465, %v467
      %v469 = vrot.slane %v272, 2
      %v470 = vrot.slane %v273, 2
      %v471 = vsel %vm438, %v469, %v470
      %v472 = vrot.slane %v274, 2
      %v473 = vsel %vm438, %v470, %v472
      %v474 = vrot.slane %v275, 2
      %v475 = vrot.slane %v276, 2
      %v476 = vsel %vm438, %v474, %v475
      %v477 = vrot.slane %v277, 2
      %v478 = vsel %vm438, %v475, %v477
      %v479 = vrot.slane %v278, 2
      %v480 = vrot.slane %v279, 2
      %v481 = vsel %vm438, %v479, %v480
      %v482 = vrot.slane %v280, 2
      %v483 = vsel %vm438, %v480, %v482
      %v484 = vrot.slane %v281, 2
      %v485 = vrot.slane %v282, 2
      %v486 = vsel %vm438, %v484, %v485
      %v487 = vrot.slane %v283, 2
      %v488 = vsel %vm438, %v485, %v487
      %v489 = vrot.slane %v284, 2
      %v490 = vrot.slane %v285, 2
      %v491 = vsel %vm438, %v489, %v490
      %v492 = vrot.slane %v286, 2
      %v493 = vsel %vm438, %v490, %v492
      %v494 = vrot.slane %v287, 2
      %v495 = vrot.slane %v288, 2
      %v496 = vsel %vm438, %v494, %v495
      %v497 = vrot.slane %v289, 2
      %v498 = vsel %vm438, %v495, %v497
      %v499 = vrot.slane %v290, 2
      %v500 = vrot.slane %v291, 2
      %v501 = vsel %vm438, %v499, %v500
      %v502 = vrot.slane %v292, 2
      %v503 = vsel %vm438, %v500, %v502
      %v504 = vrot.slane %v293, 2
      %v505 = vrot.slane %v294, 2
      %v506 = vsel %vm438, %v504, %v505
      %v507 = vrot.slane %v295, 2
      %v508 = vsel %vm438, %v505, %v507
      %v509 = vrot.slane %v296, 2
      %v510 = vrot.slane %v297, 2
      %v511 = vsel %vm438, %v509, %v510
      %v512 = vrot.slane %v298, 2
      %v513 = vsel %vm438, %v510, %v512
      %v514 = vrot.slane %v299, 2
      %v515 = vrot.slane %v300, 2
      %v516 = vsel %vm438, %v514, %v515
      %v517 = vrot.slane %v301, 2
      %v518 = vsel %vm438, %v515, %v517
      %v522 = vrot.slane %v302, 1
      %v523 = vrot.slane %v303, 1
      %v524 = vsel %vm357, %v522, %v523
      %v525 = vrot.slane %v304, 1
      %v526 = vsel %vm357, %v523, %v525
      %v527 = vrot.slane %v302, 2
      %v528 = vrot.slane %v303, 2
      %v529 = vsel %vm438, %v527, %v528
      %v530 = vrot.slane %v304, 2
      %v531 = vsel %vm438, %v528, %v530
      %532 = vrot.lane.b32.xlu0 %v360, 4
      %v533 = vpop.permute.xlu0 %532
      %534 = vrot.lane.b32.xlu0 %v362, 4
      %v535 = vpop.permute.xlu0 %534
      %536 = vrot.lane.b32.xlu0 %v365, 4
      %v537 = vpop.permute.xlu0 %536
      %538 = vrot.lane.b32.xlu0 %v367, 4
      %v539 = vpop.permute.xlu0 %538
      %540 = vrot.lane.b32.xlu0 %v370, 4
      %v541 = vpop.permute.xlu0 %540
      %542 = vrot.lane.b32.xlu0 %v372, 4
      %v543 = vpop.permute.xlu0 %542
      %544 = vrot.lane.b32.xlu0 %v375, 4
      %v545 = vpop.permute.xlu0 %544
      %546 = vrot.lane.b32.xlu0 %v377, 4
      %v547 = vpop.permute.xlu0 %546
      %548 = vrot.lane.b32.xlu0 %v380, 4
      %v549 = vpop.permute.xlu0 %548
      %550 = vrot.lane.b32.xlu0 %v382, 4
      %v551 = vpop.permute.xlu0 %550
      %552 = vrot.lane.b32.xlu0 %v385, 4
      %v553 = vpop.permute.xlu0 %552
      %554 = vrot.lane.b32.xlu0 %v387, 4
      %v555 = vpop.permute.xlu0 %554
      %556 = vrot.lane.b32.xlu0 %v390, 4
      %v557 = vpop.permute.xlu0 %556
      %558 = vrot.lane.b32.xlu0 %v392, 4
      %v559 = vpop.permute.xlu0 %558
      %560 = vrot.lane.b32.xlu0 %v395, 4
      %v561 = vpop.permute.xlu0 %560
      %562 = vrot.lane.b32.xlu0 %v397, 4
      %v563 = vpop.permute.xlu0 %562
      %564 = vrot.lane.b32.xlu0 %v400, 4
      %v565 = vpop.permute.xlu0 %564
      %566 = vrot.lane.b32.xlu0 %v402, 4
      %v567 = vpop.permute.xlu0 %566
      %568 = vrot.lane.b32.xlu0 %v405, 4
      %v569 = vpop.permute.xlu0 %568
      %570 = vrot.lane.b32.xlu0 %v407, 4
      %v571 = vpop.permute.xlu0 %570
      %572 = vrot.lane.b32.xlu0 %v410, 4
      %v573 = vpop.permute.xlu0 %572
      %574 = vrot.lane.b32.xlu0 %v412, 4
      %v575 = vpop.permute.xlu0 %574
      %576 = vrot.lane.b32.xlu0 %v415, 4
      %v577 = vpop.permute.xlu0 %576
      %578 = vrot.lane.b32.xlu0 %v417, 4
      %v579 = vpop.permute.xlu0 %578
      %580 = vrot.lane.b32.xlu0 %v420, 4
      %v581 = vpop.permute.xlu0 %580
      %582 = vrot.lane.b32.xlu0 %v422, 4
      %v583 = vpop.permute.xlu0 %582
      %584 = vrot.lane.b32.xlu0 %v425, 4
      %v585 = vpop.permute.xlu0 %584
      %586 = vrot.lane.b32.xlu0 %v427, 4
      %v587 = vpop.permute.xlu0 %586
      %588 = vrot.lane.b32.xlu0 %v430, 4
      %v589 = vpop.permute.xlu0 %588
      %590 = vrot.lane.b32.xlu0 %v432, 4
      %v591 = vpop.permute.xlu0 %590
      %592 = vrot.lane.b32.xlu0 %v435, 4
      %v593 = vpop.permute.xlu0 %592
      %594 = vrot.lane.b32.xlu0 %v437, 4
      %v595 = vpop.permute.xlu0 %594
      %628 = vrot.lane.b32.xlu0 %v441, 8
      %v629 = vpop.permute.xlu0 %628
      %630 = vrot.lane.b32.xlu0 %v443, 8
      %v631 = vpop.permute.xlu0 %630
      %632 = vrot.lane.b32.xlu0 %v446, 8
      %v633 = vpop.permute.xlu0 %632
      %634 = vrot.lane.b32.xlu0 %v448, 8
      %v635 = vpop.permute.xlu0 %634
      %636 = vrot.lane.b32.xlu0 %v451, 8
      %v637 = vpop.permute.xlu0 %636
      %638 = vrot.lane.b32.xlu0 %v453, 8
      %v639 = vpop.permute.xlu0 %638
      %640 = vrot.lane.b32.xlu0 %v456, 8
      %v641 = vpop.permute.xlu0 %640
      %642 = vrot.lane.b32.xlu0 %v458, 8
      %v643 = vpop.permute.xlu0 %642
      %644 = vrot.lane.b32.xlu0 %v461, 8
      %v645 = vpop.permute.xlu0 %644
      %646 = vrot.lane.b32.xlu0 %v463, 8
      %v647 = vpop.permute.xlu0 %646
      %648 = vrot.lane.b32.xlu0 %v466, 8
      %v649 = vpop.permute.xlu0 %648
      %650 = vrot.lane.b32.xlu0 %v468, 8
      %v651 = vpop.permute.xlu0 %650
      %652 = vrot.lane.b32.xlu0 %v471, 8
      %v653 = vpop.permute.xlu0 %652
      %654 = vrot.lane.b32.xlu0 %v473, 8
      %v655 = vpop.permute.xlu0 %654
      %656 = vrot.lane.b32.xlu0 %v476, 8
      %v657 = vpop.permute.xlu0 %656
      %658 = vrot.lane.b32.xlu0 %v478, 8
      %v659 = vpop.permute.xlu0 %658
      %660 = vrot.lane.b32.xlu0 %v481, 8
      %v661 = vpop.permute.xlu0 %660
      %662 = vrot.lane.b32.xlu0 %v483, 8
      %v663 = vpop.permute.xlu0 %662
      %664 = vrot.lane.b32.xlu0 %v486, 8
      %v665 = vpop.permute.xlu0 %664
      %666 = vrot.lane.b32.xlu0 %v488, 8
      %v667 = vpop.permute.xlu0 %666
      %668 = vrot.lane.b32.xlu0 %v491, 8
      %v669 = vpop.permute.xlu0 %668
      %670 = vrot.lane.b32.xlu0 %v493, 8
      %v671 = vpop.permute.xlu0 %670
      %672 = vrot.lane.b32.xlu0 %v496, 8
      %v673 = vpop.permute.xlu0 %672
      %674 = vrot.lane.b32.xlu0 %v498, 8
      %v675 = vpop.permute.xlu0 %674
      %676 = vrot.lane.b32.xlu0 %v501, 8
      %v677 = vpop.permute.xlu0 %676
      %678 = vrot.lane.b32.xlu0 %v503, 8
      %v679 = vpop.permute.xlu0 %678
      %680 = vrot.lane.b32.xlu0 %v506, 8
      %v681 = vpop.permute.xlu0 %680
      %682 = vrot.lane.b32.xlu0 %v508, 8
      %v683 = vpop.permute.xlu0 %682
      %684 = vrot.lane.b32.xlu0 %v511, 8
      %v685 = vpop.permute.xlu0 %684
      %686 = vrot.lane.b32.xlu0 %v513, 8
      %v687 = vpop.permute.xlu0 %686
      %688 = vrot.lane.b32.xlu0 %v516, 8
      %v689 = vpop.permute.xlu0 %688
      %690 = vrot.lane.b32.xlu0 %v518, 8
      %v691 = vpop.permute.xlu0 %690
      %724 = vrot.lane.b32.xlu0 %v257, 12
      %v725 = vpop.permute.xlu0 %724
      %726 = vrot.lane.b32.xlu0 %v258, 12
      %v727 = vpop.permute.xlu0 %726
      %728 = vrot.lane.b32.xlu0 %v260, 12
      %v729 = vpop.permute.xlu0 %728
      %730 = vrot.lane.b32.xlu0 %v261, 12
      %v731 = vpop.permute.xlu0 %730
      %732 = vrot.lane.b32.xlu0 %v263, 12
      %v733 = vpop.permute.xlu0 %732
      %734 = vrot.lane.b32.xlu0 %v264, 12
      %v735 = vpop.permute.xlu0 %734
      %736 = vrot.lane.b32.xlu0 %v266, 12
      %v737 = vpop.permute.xlu0 %736
      %738 = vrot.lane.b32.xlu0 %v267, 12
      %v739 = vpop.permute.xlu0 %738
      %740 = vrot.lane.b32.xlu0 %v269, 12
      %v741 = vpop.permute.xlu0 %740
      %742 = vrot.lane.b32.xlu0 %v270, 12
      %v743 = vpop.permute.xlu0 %742
      %744 = vrot.lane.b32.xlu0 %v272, 12
      %v745 = vpop.permute.xlu0 %744
      %746 = vrot.lane.b32.xlu0 %v273, 12
      %v747 = vpop.permute.xlu0 %746
      %748 = vrot.lane.b32.xlu0 %v275, 12
      %v749 = vpop.permute.xlu0 %748
      %750 = vrot.lane.b32.xlu0 %v276, 12
      %v751 = vpop.permute.xlu0 %750
      %752 = vrot.lane.b32.xlu0 %v278, 12
      %v753 = vpop.permute.xlu0 %752
      %754 = vrot.lane.b32.xlu0 %v279, 12
      %v755 = vpop.permute.xlu0 %754
      %756 = vrot.lane.b32.xlu0 %v281, 12
      %v757 = vpop.permute.xlu0 %756
      %758 = vrot.lane.b32.xlu0 %v282, 12
      %v759 = vpop.permute.xlu0 %758
      %760 = vrot.lane.b32.xlu0 %v284, 12
      %v761 = vpop.permute.xlu0 %760
      %762 = vrot.lane.b32.xlu0 %v285, 12
      %v763 = vpop.permute.xlu0 %762
      %764 = vrot.lane.b32.xlu0 %v287, 12
      %v765 = vpop.permute.xlu0 %764
      %766 = vrot.lane.b32.xlu0 %v288, 12
      %v767 = vpop.permute.xlu0 %766
      %768 = vrot.lane.b32.xlu0 %v290, 12
      %v769 = vpop.permute.xlu0 %768
      %770 = vrot.lane.b32.xlu0 %v291, 12
      %v771 = vpop.permute.xlu0 %770
      %772 = vrot.lane.b32.xlu0 %v293, 12
      %v773 = vpop.permute.xlu0 %772
      %774 = vrot.lane.b32.xlu0 %v294, 12
      %v775 = vpop.permute.xlu0 %774
      %776 = vrot.lane.b32.xlu0 %v296, 12
      %v777 = vpop.permute.xlu0 %776
      %778 = vrot.lane.b32.xlu0 %v297, 12
      %v779 = vpop.permute.xlu0 %778
      %780 = vrot.lane.b32.xlu0 %v299, 12
      %v781 = vpop.permute.xlu0 %780
      %782 = vrot.lane.b32.xlu0 %v300, 12
      %v783 = vpop.permute.xlu0 %782
      %784 = vrot.lane.b32.xlu0 %v302, 12
      %v785 = vpop.permute.xlu0 %784
      %786 = vrot.lane.b32.xlu0 %v303, 12
      %v787 = vpop.permute.xlu0 %786
      %820 = vrot.lane.b32.xlu0 %v365, 16
      %v821 = vpop.permute.xlu0 %820
      %822 = vrot.lane.b32.xlu0 %v367, 16
      %v823 = vpop.permute.xlu0 %822
      %824 = vrot.lane.b32.xlu0 %v370, 16
      %v825 = vpop.permute.xlu0 %824
      %826 = vrot.lane.b32.xlu0 %v372, 16
      %v827 = vpop.permute.xlu0 %826
      %828 = vrot.lane.b32.xlu0 %v375, 16
      %v829 = vpop.permute.xlu0 %828
      %830 = vrot.lane.b32.xlu0 %v377, 16
      %v831 = vpop.permute.xlu0 %830
      %832 = vrot.lane.b32.xlu0 %v380, 16
      %v833 = vpop.permute.xlu0 %832
      %834 = vrot.lane.b32.xlu0 %v382, 16
      %v835 = vpop.permute.xlu0 %834
      %836 = vrot.lane.b32.xlu0 %v385, 16
      %v837 = vpop.permute.xlu0 %836
      %838 = vrot.lane.b32.xlu0 %v387, 16
      %v839 = vpop.permute.xlu0 %838
      %840 = vrot.lane.b32.xlu0 %v390, 16
      %v841 = vpop.permute.xlu0 %840
      %842 = vrot.lane.b32.xlu0 %v392, 16
      %v843 = vpop.permute.xlu0 %842
      %844 = vrot.lane.b32.xlu0 %v395, 16
      %v845 = vpop.permute.xlu0 %844
      %846 = vrot.lane.b32.xlu0 %v397, 16
      %v847 = vpop.permute.xlu0 %846
      %848 = vrot.lane.b32.xlu0 %v400, 16
      %v849 = vpop.permute.xlu0 %848
      %850 = vrot.lane.b32.xlu0 %v402, 16
      %v851 = vpop.permute.xlu0 %850
      %852 = vrot.lane.b32.xlu0 %v405, 16
      %v853 = vpop.permute.xlu0 %852
      %854 = vrot.lane.b32.xlu0 %v407, 16
      %v855 = vpop.permute.xlu0 %854
      %856 = vrot.lane.b32.xlu0 %v410, 16
      %v857 = vpop.permute.xlu0 %856
      %858 = vrot.lane.b32.xlu0 %v412, 16
      %v859 = vpop.permute.xlu0 %858
      %860 = vrot.lane.b32.xlu0 %v415, 16
      %v861 = vpop.permute.xlu0 %860
      %862 = vrot.lane.b32.xlu0 %v417, 16
      %v863 = vpop.permute.xlu0 %862
      %864 = vrot.lane.b32.xlu0 %v420, 16
      %v865 = vpop.permute.xlu0 %864
      %866 = vrot.lane.b32.xlu0 %v422, 16
      %v867 = vpop.permute.xlu0 %866
      %868 = vrot.lane.b32.xlu0 %v425, 16
      %v869 = vpop.permute.xlu0 %868
      %870 = vrot.lane.b32.xlu0 %v427, 16
      %v871 = vpop.permute.xlu0 %870
      %872 = vrot.lane.b32.xlu0 %v430, 16
      %v873 = vpop.permute.xlu0 %872
      %874 = vrot.lane.b32.xlu0 %v432, 16
      %v875 = vpop.permute.xlu0 %874
      %876 = vrot.lane.b32.xlu0 %v435, 16
      %v877 = vpop.permute.xlu0 %876
      %878 = vrot.lane.b32.xlu0 %v437, 16
      %v879 = vpop.permute.xlu0 %878
      %880 = vrot.lane.b32.xlu0 %v524, 16
      %v881 = vpop.permute.xlu0 %880
      %882 = vrot.lane.b32.xlu0 %v526, 16
      %v883 = vpop.permute.xlu0 %882
      %916 = vrot.lane.b32.xlu0 %v446, 20
      %v917 = vpop.permute.xlu0 %916
      %918 = vrot.lane.b32.xlu0 %v448, 20
      %v919 = vpop.permute.xlu0 %918
      %920 = vrot.lane.b32.xlu0 %v451, 20
      %v921 = vpop.permute.xlu0 %920
      %922 = vrot.lane.b32.xlu0 %v453, 20
      %v923 = vpop.permute.xlu0 %922
      %924 = vrot.lane.b32.xlu0 %v456, 20
      %v925 = vpop.permute.xlu0 %924
      %926 = vrot.lane.b32.xlu0 %v458, 20
      %v927 = vpop.permute.xlu0 %926
      %928 = vrot.lane.b32.xlu0 %v461, 20
      %v929 = vpop.permute.xlu0 %928
      %930 = vrot.lane.b32.xlu0 %v463, 20
      %v931 = vpop.permute.xlu0 %930
      %932 = vrot.lane.b32.xlu0 %v466, 20
      %v933 = vpop.permute.xlu0 %932
      %934 = vrot.lane.b32.xlu0 %v468, 20
      %v935 = vpop.permute.xlu0 %934
      %936 = vrot.lane.b32.xlu0 %v471, 20
      %v937 = vpop.permute.xlu0 %936
      %938 = vrot.lane.b32.xlu0 %v473, 20
      %v939 = vpop.permute.xlu0 %938
      %940 = vrot.lane.b32.xlu0 %v476, 20
      %v941 = vpop.permute.xlu0 %940
      %942 = vrot.lane.b32.xlu0 %v478, 20
      %v943 = vpop.permute.xlu0 %942
      %944 = vrot.lane.b32.xlu0 %v481, 20
      %v945 = vpop.permute.xlu0 %944
      %946 = vrot.lane.b32.xlu0 %v483, 20
      %v947 = vpop.permute.xlu0 %946
      %948 = vrot.lane.b32.xlu0 %v486, 20
      %v949 = vpop.permute.xlu0 %948
      %950 = vrot.lane.b32.xlu0 %v488, 20
      %v951 = vpop.permute.xlu0 %950
      %952 = vrot.lane.b32.xlu0 %v491, 20
      %v953 = vpop.permute.xlu0 %952
      %954 = vrot.lane.b32.xlu0 %v493, 20
      %v955 = vpop.permute.xlu0 %954
      %956 = vrot.lane.b32.xlu0 %v496, 20
      %v957 = vpop.permute.xlu0 %956
      %958 = vrot.lane.b32.xlu0 %v498, 20
      %v959 = vpop.permute.xlu0 %958
      %960 = vrot.lane.b32.xlu0 %v501, 20
      %v961 = vpop.permute.xlu0 %960
      %962 = vrot.lane.b32.xlu0 %v503, 20
      %v963 = vpop.permute.xlu0 %962
      %964 = vrot.lane.b32.xlu0 %v506, 20
      %v965 = vpop.permute.xlu0 %964
      %966 = vrot.lane.b32.xlu0 %v508, 20
      %v967 = vpop.permute.xlu0 %966
      %968 = vrot.lane.b32.xlu0 %v511, 20
      %v969 = vpop.permute.xlu0 %968
      %970 = vrot.lane.b32.xlu0 %v513, 20
      %v971 = vpop.permute.xlu0 %970
      %972 = vrot.lane.b32.xlu0 %v516, 20
      %v973 = vpop.permute.xlu0 %972
      %974 = vrot.lane.b32.xlu0 %v518, 20
      %v975 = vpop.permute.xlu0 %974
      %976 = vrot.lane.b32.xlu0 %v529, 20
      %v977 = vpop.permute.xlu0 %976
      %978 = vrot.lane.b32.xlu0 %v531, 20
      %v979 = vpop.permute.xlu0 %978
      %vm1012 = vcmask 31744
      %v1013 = vsel %vm1012, %v254, %v533
      %v1014 = vsel %vm1012, %v255, %v535
      %v1015 = vsel %vm1012, %v257, %v537
      %v1016 = vsel %vm1012, %v258, %v539
      %v1017 = vsel %vm1012, %v260, %v541
      %v1018 = vsel %vm1012, %v261, %v543
      %v1019 = vsel %vm1012, %v263, %v545
      %v1020 = vsel %vm1012, %v264, %v547
      %v1021 = vsel %vm1012, %v266, %v549
      %v1022 = vsel %vm1012, %v267, %v551
      %v1023 = vsel %vm1012, %v269, %v553
      %v1024 = vsel %vm1012, %v270, %v555
      %v1025 = vsel %vm1012, %v272, %v557
      %v1026 = vsel %vm1012, %v273, %v559
      %v1027 = vsel %vm1012, %v275, %v561
      %v1028 = vsel %vm1012, %v276, %v563
      %v1029 = vsel %vm1012, %v278, %v565
      %v1030 = vsel %vm1012, %v279, %v567
      %v1031 = vsel %vm1012, %v281, %v569
      %v1032 = vsel %vm1012, %v282, %v571
      %v1033 = vsel %vm1012, %v284, %v573
      %v1034 = vsel %vm1012, %v285, %v575
      %v1035 = vsel %vm1012, %v287, %v577
      %v1036 = vsel %vm1012, %v288, %v579
      %v1037 = vsel %vm1012, %v290, %v581
      %v1038 = vsel %vm1012, %v291, %v583
      %v1039 = vsel %vm1012, %v293, %v585
      %v1040 = vsel %vm1012, %v294, %v587
      %v1041 = vsel %vm1012, %v296, %v589
      %v1042 = vsel %vm1012, %v297, %v591
      %v1043 = vsel %vm1012, %v299, %v593
      %v1044 = vsel %vm1012, %v300, %v595
      %vm1045 = vcmask 64512
      %v1046 = vsel %vm1045, %v1013, %v629
      %v1047 = vsel %vm1045, %v1014, %v631
      %v1048 = vsel %vm1045, %v1015, %v633
      %v1049 = vsel %vm1045, %v1016, %v635
      %v1050 = vsel %vm1045, %v1017, %v637
      %v1051 = vsel %vm1045, %v1018, %v639
      %v1052 = vsel %vm1045, %v1019, %v641
      %v1053 = vsel %vm1045, %v1020, %v643
      %v1054 = vsel %vm1045, %v1021, %v645
      %v1055 = vsel %vm1045, %v1022, %v647
      %v1056 = vsel %vm1045, %v1023, %v649
      %v1057 = vsel %vm1045, %v1024, %v651
      %v1058 = vsel %vm1045, %v1025, %v653
      %v1059 = vsel %vm1045, %v1026, %v655
      %v1060 = vsel %vm1045, %v1027, %v657
      %v1061 = vsel %vm1045, %v1028, %v659
      %v1062 = vsel %vm1045, %v1029, %v661
      %v1063 = vsel %vm1045, %v1030, %v663
      %v1064 = vsel %vm1045, %v1031, %v665
      %v1065 = vsel %vm1045, %v1032, %v667
      %v1066 = vsel %vm1045, %v1033, %v669
      %v1067 = vsel %vm1045, %v1034, %v671
      %v1068 = vsel %vm1045, %v1035, %v673
      %v1069 = vsel %vm1045, %v1036, %v675
      %v1070 = vsel %vm1045, %v1037, %v677
      %v1071 = vsel %vm1045, %v1038, %v679
      %v1072 = vsel %vm1045, %v1039, %v681
      %v1073 = vsel %vm1045, %v1040, %v683
      %v1074 = vsel %vm1045, %v1041, %v685
      %v1075 = vsel %vm1045, %v1042, %v687
      %v1076 = vsel %vm1045, %v1043, %v689
      %v1077 = vsel %vm1045, %v1044, %v691
      %vm1078 = vcmask 97280
      %v1079 = vsel %vm1078, %v1046, %v725
      %v1080 = vsel %vm1078, %v1047, %v727
      %v1081 = vsel %vm1078, %v1048, %v729
      %v1082 = vsel %vm1078, %v1049, %v731
      %v1083 = vsel %vm1078, %v1050, %v733
      %v1084 = vsel %vm1078, %v1051, %v735
      %v1085 = vsel %vm1078, %v1052, %v737
      %v1086 = vsel %vm1078, %v1053, %v739
      %v1087 = vsel %vm1078, %v1054, %v741
      %v1088 = vsel %vm1078, %v1055, %v743
      %v1089 = vsel %vm1078, %v1056, %v745
      %v1090 = vsel %vm1078, %v1057, %v747
      %v1091 = vsel %vm1078, %v1058, %v749
      %v1092 = vsel %vm1078, %v1059, %v751
      %v1093 = vsel %vm1078, %v1060, %v753
      %v1094 = vsel %vm1078, %v1061, %v755
      %v1095 = vsel %vm1078, %v1062, %v757
      %v1096 = vsel %vm1078, %v1063, %v759
      %v1097 = vsel %vm1078, %v1064, %v761
      %v1098 = vsel %vm1078, %v1065, %v763
      %v1099 = vsel %vm1078, %v1066, %v765
      %v1100 = vsel %vm1078, %v1067, %v767
      %v1101 = vsel %vm1078, %v1068, %v769
      %v1102 = vsel %vm1078, %v1069, %v771
      %v1103 = vsel %vm1078, %v1070, %v773
      %v1104 = vsel %vm1078, %v1071, %v775
      %v1105 = vsel %vm1078, %v1072, %v777
      %v1106 = vsel %vm1078, %v1073, %v779
      %v1107 = vsel %vm1078, %v1074, %v781
      %v1108 = vsel %vm1078, %v1075, %v783
      %v1109 = vsel %vm1078, %v1076, %v785
      %v1110 = vsel %vm1078, %v1077, %v787
      %vm1111 = vcmask 130048
      %v1112 = vsel %vm1111, %v1079, %v821
      %v1113 = vsel %vm1111, %v1080, %v823
      %v1114 = vsel %vm1111, %v1081, %v825
      %v1115 = vsel %vm1111, %v1082, %v827
      %v1116 = vsel %vm1111, %v1083, %v829
      %v1117 = vsel %vm1111, %v1084, %v831
      %v1118 = vsel %vm1111, %v1085, %v833
      %v1119 = vsel %vm1111, %v1086, %v835
      %v1120 = vsel %vm1111, %v1087, %v837
      %v1121 = vsel %vm1111, %v1088, %v839
      %v1122 = vsel %vm1111, %v1089, %v841
      %v1123 = vsel %vm1111, %v1090, %v843
      %v1124 = vsel %vm1111, %v1091, %v845
      %v1125 = vsel %vm1111, %v1092, %v847
      %v1126 = vsel %vm1111, %v1093, %v849
      %v1127 = vsel %vm1111, %v1094, %v851
      %v1128 = vsel %vm1111, %v1095, %v853
      %v1129 = vsel %vm1111, %v1096, %v855
      %v1130 = vsel %vm1111, %v1097, %v857
      %v1131 = vsel %vm1111, %v1098, %v859
      %v1132 = vsel %vm1111, %v1099, %v861
      %v1133 = vsel %vm1111, %v1100, %v863
      %v1134 = vsel %vm1111, %v1101, %v865
      %v1135 = vsel %vm1111, %v1102, %v867
      %v1136 = vsel %vm1111, %v1103, %v869
      %v1137 = vsel %vm1111, %v1104, %v871
      %v1138 = vsel %vm1111, %v1105, %v873
      %v1139 = vsel %vm1111, %v1106, %v875
      %v1140 = vsel %vm1111, %v1107, %v877
      %v1141 = vsel %vm1111, %v1108, %v879
      %v1142 = vsel %vm1111, %v1109, %v881
      %v1143 = vsel %vm1111, %v1110, %v883
      %vm1144 = vcmask 162816
      %v1145 = vsel %vm1144, %v1112, %v917
      %v1146 = vsel %vm1144, %v1113, %v919
      %v1147 = vsel %vm1144, %v1114, %v921
      %v1148 = vsel %vm1144, %v1115, %v923
      %v1149 = vsel %vm1144, %v1116, %v925
      %v1150 = vsel %vm1144, %v1117, %v927
      %v1151 = vsel %vm1144, %v1118, %v929
      %v1152 = vsel %vm1144, %v1119, %v931
      %v1153 = vsel %vm1144, %v1120, %v933
      %v1154 = vsel %vm1144, %v1121, %v935
      %v1155 = vsel %vm1144, %v1122, %v937
      %v1156 = vsel %vm1144, %v1123, %v939
      %v1157 = vsel %vm1144, %v1124, %v941
      %v1158 = vsel %vm1144, %v1125, %v943
      %v1159 = vsel %vm1144, %v1126, %v945
      %v1160 = vsel %vm1144, %v1127, %v947
      %v1161 = vsel %vm1144, %v1128, %v949
      %v1162 = vsel %vm1144, %v1129, %v951
      %v1163 = vsel %vm1144, %v1130, %v953
      %v1164 = vsel %vm1144, %v1131, %v955
      %v1165 = vsel %vm1144, %v1132, %v957
      %v1166 = vsel %vm1144, %v1133, %v959
      %v1167 = vsel %vm1144, %v1134, %v961
      %v1168 = vsel %vm1144, %v1135, %v963
      %v1169 = vsel %vm1144, %v1136, %v965
      %v1170 = vsel %vm1144, %v1137, %v967
      %v1171 = vsel %vm1144, %v1138, %v969
      %v1172 = vsel %vm1144, %v1139, %v971
      %v1173 = vsel %vm1144, %v1140, %v973
      %v1174 = vsel %vm1144, %v1141, %v975
      %v1175 = vsel %vm1144, %v1142, %v977
      %v1176 = vsel %vm1144, %v1143, %v979
      %v1177 = vld [vmem:[%s237] sm:$0xff]
      %v1178 = vld [vmem:[%s237 + $0x8] sm:$0xff]
      %v1179 = vld [vmem:[%s237 + $0x10] sm:$0xff]
      %v1181 = vperm.slane %v308, 0
      %vm1183 = vcmask 195584
      %v1185 = vsel %vm1183, %v1145, 0
      %v1188 = vsel %vm1183, %v1146, 0
      %v1191 = vsel %vm1183, %v1147, 0
      %v1194 = vsel %vm1183, %v1148, 0
      %v1197 = vsel %vm1183, %v1149, 0
      %v1200 = vsel %vm1183, %v1150, 0
      %v1203 = vsel %vm1183, %v1151, 0
      %v1206 = vsel %vm1183, %v1152, 0
      %v1209 = vsel %vm1183, %v1153, 0
      %v1212 = vsel %vm1183, %v1154, 0
      %v1215 = vsel %vm1183, %v1155, 0
      %v1218 = vsel %vm1183, %v1156, 0
      %v1221 = vsel %vm1183, %v1157, 0
      %v1224 = vsel %vm1183, %v1158, 0
      %v1227 = vsel %vm1183, %v1159, 0
      %v1230 = vsel %vm1183, %v1160, 0
      %v1233 = vsel %vm1183, %v1161, 0
      %v1236 = vsel %vm1183, %v1162, 0
      %v1239 = vsel %vm1183, %v1163, 0
      %v1242 = vsel %vm1183, %v1164, 0
      %v1245 = vsel %vm1183, %v1165, 0
      %v1248 = vsel %vm1183, %v1166, 0
      %v1251 = vsel %vm1183, %v1167, 0
      %v1254 = vsel %vm1183, %v1168, 0
      %v1257 = vsel %vm1183, %v1169, 0
      %v1260 = vsel %vm1183, %v1170, 0
      %v1263 = vsel %vm1183, %v1171, 0
      %v1266 = vsel %vm1183, %v1172, 0
      %v1269 = vsel %vm1183, %v1173, 0
      %v1272 = vsel %vm1183, %v1174, 0
      %v1275 = vsel %vm1183, %v1175, 0
      %v1278 = vsel %vm1183, %v1176, 0
      %1280 = vmatpush.msra.mxu0 0.0
      %1281 = vmatpush.msra.mxu0 0.0
      %1282 = vmatpush.msra.mxu0 0.0
      %1283 = vmatpush.msra.mxu0 0.0
      %1284 = vmatpush.msra.mxu0 0.0
      %1285 = vmatpush.msra.mxu0 0.0
      %1286 = vmatpush.msra.mxu0 0.0
      %1287 = vmatpush.msra.mxu0 0.0
      %1288 = vmatpush.msra.mxu0 0.0
      %1289 = vmatpush.msra.mxu0 0.0
      %1290 = vmatpush.msra.mxu0 0.0
      %1291 = vmatpush.msra.mxu0 0.0
      %1292 = vmatpush.msra.mxu0 0.0
      %1293 = vmatpush.msra.mxu0 %v1179
      %1294 = vmatpush.msra.mxu0 %v1178
      %1295 = vmatpush.msra.mxu0 %v1177
      %1296 = vmatmul.f32.gmra.mxu0 %v1185
      %v1297 = vpop.f32.mrf.mxu0
      %v1298 = vadd.f32 %v1181, %v1297
      %1299 = vmatmul.f32.gmra.mxu0 %v1188
      %v1300 = vpop.f32.mrf.mxu0
      %v1301 = vadd.f32 %v1181, %v1300
      %1302 = vmatmul.f32.gmra.mxu0 %v1191
      %v1303 = vpop.f32.mrf.mxu0
      %v1304 = vadd.f32 %v1181, %v1303
      %1305 = vmatmul.f32.gmra.mxu0 %v1194
      %v1306 = vpop.f32.mrf.mxu0
      %v1307 = vadd.f32 %v1181, %v1306
      %1308 = vmatmul.f32.gmra.mxu0 %v1197
      %v1309 = vpop.f32.mrf.mxu0
      %v1310 = vadd.f32 %v1181, %v1309
      %1311 = vmatmul.f32.gmra.mxu0 %v1200
      %v1312 = vpop.f32.mrf.mxu0
      %v1313 = vadd.f32 %v1181, %v1312
      %1314 = vmatmul.f32.gmra.mxu0 %v1203
      %v1315 = vpop.f32.mrf.mxu0
      %v1316 = vadd.f32 %v1181, %v1315
      %1317 = vmatmul.f32.gmra.mxu0 %v1206
      %v1318 = vpop.f32.mrf.mxu0
      %v1319 = vadd.f32 %v1181, %v1318
      %1320 = vmatmul.f32.gmra.mxu0 %v1209
      %v1321 = vpop.f32.mrf.mxu0
      %v1322 = vadd.f32 %v1181, %v1321
      %1323 = vmatmul.f32.gmra.mxu0 %v1212
      %v1324 = vpop.f32.mrf.mxu0
      %v1325 = vadd.f32 %v1181, %v1324
      %1326 = vmatmul.f32.gmra.mxu0 %v1215
      %v1327 = vpop.f32.mrf.mxu0
      %v1328 = vadd.f32 %v1181, %v1327
      %1329 = vmatmul.f32.gmra.mxu0 %v1218
      %v1330 = vpop.f32.mrf.mxu0
      %v1331 = vadd.f32 %v1181, %v1330
      %1332 = vmatmul.f32.gmra.mxu0 %v1221
      %v1333 = vpop.f32.mrf.mxu0
      %v1334 = vadd.f32 %v1181, %v1333
      %1335 = vmatmul.f32.gmra.mxu0 %v1224
      %v1336 = vpop.f32.mrf.mxu0
      %v1337 = vadd.f32 %v1181, %v1336
      %1338 = vmatmul.f32.gmra.mxu0 %v1227
      %v1339 = vpop.f32.mrf.mxu0
      %v1340 = vadd.f32 %v1181, %v1339
      %1341 = vmatmul.f32.gmra.mxu0 %v1230
      %v1342 = vpop.f32.mrf.mxu0
      %v1343 = vadd.f32 %v1181, %v1342
      %1344 = vmatmul.f32.gmra.mxu0 %v1233
      %v1345 = vpop.f32.mrf.mxu0
      %v1346 = vadd.f32 %v1181, %v1345
      %1347 = vmatmul.f32.gmra.mxu0 %v1236
      %v1348 = vpop.f32.mrf.mxu0
      %v1349 = vadd.f32 %v1181, %v1348
      %1350 = vmatmul.f32.gmra.mxu0 %v1239
      %v1351 = vpop.f32.mrf.mxu0
      %v1352 = vadd.f32 %v1181, %v1351
      %1353 = vmatmul.f32.gmra.mxu0 %v1242
      %v1354 = vpop.f32.mrf.mxu0
      %v1355 = vadd.f32 %v1181, %v1354
      %1356 = vmatmul.f32.gmra.mxu0 %v1245
      %v1357 = vpop.f32.mrf.mxu0
      %v1358 = vadd.f32 %v1181, %v1357
      %1359 = vmatmul.f32.gmra.mxu0 %v1248
      %v1360 = vpop.f32.mrf.mxu0
      %v1361 = vadd.f32 %v1181, %v1360
      %1362 = vmatmul.f32.gmra.mxu0 %v1251
      %v1363 = vpop.f32.mrf.mxu0
      %v1364 = vadd.f32 %v1181, %v1363
      %1365 = vmatmul.f32.gmra.mxu0 %v1254
      %v1366 = vpop.f32.mrf.mxu0
      %v1367 = vadd.f32 %v1181, %v1366
      %1368 = vmatmul.f32.gmra.mxu0 %v1257
      %v1369 = vpop.f32.mrf.mxu0
      %v1370 = vadd.f32 %v1181, %v1369
      %1371 = vmatmul.f32.gmra.mxu0 %v1260
      %v1372 = vpop.f32.mrf.mxu0
      %v1373 = vadd.f32 %v1181, %v1372
      %1374 = vmatmul.f32.gmra.mxu0 %v1263
      %v1375 = vpop.f32.mrf.mxu0
      %v1376 = vadd.f32 %v1181, %v1375
      %1377 = vmatmul.f32.gmra.mxu0 %v1266
      %v1378 = vpop.f32.mrf.mxu0
      %v1379 = vadd.f32 %v1181, %v1378
      %1380 = vmatmul.f32.gmra.mxu0 %v1269
      %v1381 = vpop.f32.mrf.mxu0
      %v1382 = vadd.f32 %v1181, %v1381
      %1383 = vmatmul.f32.gmra.mxu0 %v1272
      %v1384 = vpop.f32.mrf.mxu0
      %v1385 = vadd.f32 %v1181, %v1384
      %1386 = vmatmul.f32.gmra.mxu0 %v1275
      %v1387 = vpop.f32.mrf.mxu0
      %v1388 = vadd.f32 %v1181, %v1387
      %1389 = vmatmul.f32.gmra.mxu0 %v1278
      %v1390 = vpop.f32.mrf.mxu0
      %v1391 = vadd.f32 %v1181, %v1390
      %1392 = vdwg.mxu0
      %1393 = vst.msk [vmem:[%s252] sm:$0xff] %vm1111, %v1298
      %1394 = vst.msk [vmem:[%s252 + $0x8] sm:$0xff] %vm1111, %v1301
      %1395 = vst.msk [vmem:[%s252 + $0x10] sm:$0xff] %vm1111, %v1304
      %1396 = vst.msk [vmem:[%s252 + $0x18] sm:$0xff] %vm1111, %v1307
      %1397 = vst.msk [vmem:[%s252 + $0x20] sm:$0xff] %vm1111, %v1310
      %1398 = vst.msk [vmem:[%s252 + $0x28] sm:$0xff] %vm1111, %v1313
      %1399 = vst.msk [vmem:[%s252 + $0x30] sm:$0xff] %vm1111, %v1316
      %1400 = vst.msk [vmem:[%s252 + $0x38] sm:$0xff] %vm1111, %v1319
      %1401 = vst.msk [vmem:[%s252 + $0x40] sm:$0xff] %vm1111, %v1322
      %1402 = vst.msk [vmem:[%s252 + $0x48] sm:$0xff] %vm1111, %v1325
      %1403 = vst.msk [vmem:[%s252 + $0x50] sm:$0xff] %vm1111, %v1328
      %1404 = vst.msk [vmem:[%s252 + $0x58] sm:$0xff] %vm1111, %v1331
      %1405 = vst.msk [vmem:[%s252 + $0x60] sm:$0xff] %vm1111, %v1334
      %1406 = vst.msk [vmem:[%s252 + $0x68] sm:$0xff] %vm1111, %v1337
      %1407 = vst.msk [vmem:[%s252 + $0x70] sm:$0xff] %vm1111, %v1340
      %1408 = vst.msk [vmem:[%s252 + $0x78] sm:$0xff] %vm1111, %v1343
      %1409 = vst.msk [vmem:[%s252 + $0x80] sm:$0xff] %vm1111, %v1346
      %1410 = vst.msk [vmem:[%s252 + $0x88] sm:$0xff] %vm1111, %v1349
      %1411 = vst.msk [vmem:[%s252 + $0x90] sm:$0xff] %vm1111, %v1352
      %1412 = vst.msk [vmem:[%s252 + $0x98] sm:$0xff] %vm1111, %v1355
      %1413 = vst.msk [vmem:[%s252 + $0xa0] sm:$0xff] %vm1111, %v1358
      %1414 = vst.msk [vmem:[%s252 + $0xa8] sm:$0xff] %vm1111, %v1361
      %1415 = vst.msk [vmem:[%s252 + $0xb0] sm:$0xff] %vm1111, %v1364
      %1416 = vst.msk [vmem:[%s252 + $0xb8] sm:$0xff] %vm1111, %v1367
      %1417 = vst.msk [vmem:[%s252 + $0xc0] sm:$0xff] %vm1111, %v1370
      %1418 = vst.msk [vmem:[%s252 + $0xc8] sm:$0xff] %vm1111, %v1373
      %1419 = vst.msk [vmem:[%s252 + $0xd0] sm:$0xff] %vm1111, %v1376
      %1420 = vst.msk [vmem:[%s252 + $0xd8] sm:$0xff] %vm1111, %v1379
      %1421 = vst.msk [vmem:[%s252 + $0xe0] sm:$0xff] %vm1111, %v1382
      %1422 = vst.msk [vmem:[%s252 + $0xe8] sm:$0xff] %vm1111, %v1385
      %1423 = vst.msk [vmem:[%s252 + $0xf0] sm:$0xff] %vm1111, %v1388
      %1424 = vst.msk [vmem:[%s252 + $0xf8] sm:$0xff] %vm1111, %v1391
      %v1428 = vrot.slane %v305, 1
      %v1429 = vrot.slane %v306, 1
      %v1430 = vsel %vm357, %v1428, %v1429
      %v1431 = vrot.slane %v307, 1
      %v1432 = vsel %vm357, %v1429, %v1431
      %v1433 = vrot.slane %v305, 2
      %v1434 = vrot.slane %v306, 2
      %v1435 = vsel %vm438, %v1433, %v1434
      %v1436 = vrot.slane %v307, 2
      %v1437 = vsel %vm438, %v1434, %v1436
      %1438 = vrot.lane.b32.xlu0 %v524, 4
      %v1439 = vpop.permute.xlu0 %1438
      %1440 = vrot.lane.b32.xlu0 %v526, 4
      %v1441 = vpop.permute.xlu0 %1440
      %1444 = vrot.lane.b32.xlu0 %v529, 8
      %v1445 = vpop.permute.xlu0 %1444
      %1446 = vrot.lane.b32.xlu0 %v531, 8
      %v1447 = vpop.permute.xlu0 %1446
      %1450 = vrot.lane.b32.xlu0 %v305, 12
      %v1451 = vpop.permute.xlu0 %1450
      %1452 = vrot.lane.b32.xlu0 %v306, 12
      %v1453 = vpop.permute.xlu0 %1452
      %1456 = vrot.lane.b32.xlu0 %v1430, 16
      %v1457 = vpop.permute.xlu0 %1456
      %1458 = vrot.lane.b32.xlu0 %v1432, 16
      %v1459 = vpop.permute.xlu0 %1458
      %1462 = vrot.lane.b32.xlu0 %v1435, 20
      %v1463 = vpop.permute.xlu0 %1462
      %1464 = vrot.lane.b32.xlu0 %v1437, 20
      %v1465 = vpop.permute.xlu0 %1464
      %v1468 = vsel %vm1012, %v302, %v1439
      %v1469 = vsel %vm1012, %v303, %v1441
      %v1470 = vsel %vm1045, %v1468, %v1445
      %v1471 = vsel %vm1045, %v1469, %v1447
      %v1472 = vsel %vm1078, %v1470, %v1451
      %v1473 = vsel %vm1078, %v1471, %v1453
      %v1474 = vsel %vm1111, %v1472, %v1457
      %v1475 = vsel %vm1111, %v1473, %v1459
      %v1476 = vsel %vm1144, %v1474, %v1463
      %v1477 = vsel %vm1144, %v1475, %v1465
      %s1478 = scalar_lea.vmem %s237, 24
      %v1479 = vld [vmem:[%s1478] sm:$0xff]
      %v1480 = vld [vmem:[%s1478 + $0x8] sm:$0xff]
      %v1481 = vld [vmem:[%s1478 + $0x10] sm:$0xff]
      %v1483 = vsel %vm1183, %v1476, 0
      %v1486 = vsel %vm1183, %v1477, 0
      %1488 = vmatpush.msra.mxu0 0.0
      %1489 = vmatpush.msra.mxu0 0.0
      %1490 = vmatpush.msra.mxu0 0.0
      %1491 = vmatpush.msra.mxu0 0.0
      %1492 = vmatpush.msra.mxu0 0.0
      %1493 = vmatpush.msra.mxu0 0.0
      %1494 = vmatpush.msra.mxu0 0.0
      %1495 = vmatpush.msra.mxu0 0.0
      %1496 = vmatpush.msra.mxu0 0.0
      %1497 = vmatpush.msra.mxu0 0.0
      %1498 = vmatpush.msra.mxu0 0.0
      %1499 = vmatpush.msra.mxu0 0.0
      %1500 = vmatpush.msra.mxu0 0.0
      %1501 = vmatpush.msra.mxu0 %v1481
      %1502 = vmatpush.msra.mxu0 %v1480
      %1503 = vmatpush.msra.mxu0 %v1479
      %1504 = vmatmul.f32.gmra.mxu0 %v1191
      %v1505 = vpop.f32.mrf.mxu0
      %v1506 = vadd.f32 %v1181, %v1505
      %1507 = vmatmul.f32.gmra.mxu0 %v1194
      %v1508 = vpop.f32.mrf.mxu0
      %v1509 = vadd.f32 %v1181, %v1508
      %1510 = vmatmul.f32.gmra.mxu0 %v1197
      %v1511 = vpop.f32.mrf.mxu0
      %v1512 = vadd.f32 %v1181, %v1511
      %1513 = vmatmul.f32.gmra.mxu0 %v1200
      %v1514 = vpop.f32.mrf.mxu0
      %v1515 = vadd.f32 %v1181, %v1514
      %1516 = vmatmul.f32.gmra.mxu0 %v1203
      %v1517 = vpop.f32.mrf.mxu0
      %v1518 = vadd.f32 %v1181, %v1517
      %1519 = vmatmul.f32.gmra.mxu0 %v1206
      %v1520 = vpop.f32.mrf.mxu0
      %v1521 = vadd.f32 %v1181, %v1520
      %1522 = vmatmul.f32.gmra.mxu0 %v1209
      %v1523 = vpop.f32.mrf.mxu0
      %v1524 = vadd.f32 %v1181, %v1523
      %1525 = vmatmul.f32.gmra.mxu0 %v1212
      %v1526 = vpop.f32.mrf.mxu0
      %v1527 = vadd.f32 %v1181, %v1526
      %1528 = vmatmul.f32.gmra.mxu0 %v1215
      %v1529 = vpop.f32.mrf.mxu0
      %v1530 = vadd.f32 %v1181, %v1529
      %1531 = vmatmul.f32.gmra.mxu0 %v1218
      %v1532 = vpop.f32.mrf.mxu0
      %v1533 = vadd.f32 %v1181, %v1532
      %1534 = vmatmul.f32.gmra.mxu0 %v1221
      %v1535 = vpop.f32.mrf.mxu0
      %v1536 = vadd.f32 %v1181, %v1535
      %1537 = vmatmul.f32.gmra.mxu0 %v1224
      %v1538 = vpop.f32.mrf.mxu0
      %v1539 = vadd.f32 %v1181, %v1538
      %1540 = vmatmul.f32.gmra.mxu0 %v1227
      %v1541 = vpop.f32.mrf.mxu0
      %v1542 = vadd.f32 %v1181, %v1541
      %1543 = vmatmul.f32.gmra.mxu0 %v1230
      %v1544 = vpop.f32.mrf.mxu0
      %v1545 = vadd.f32 %v1181, %v1544
      %1546 = vmatmul.f32.gmra.mxu0 %v1233
      %v1547 = vpop.f32.mrf.mxu0
      %v1548 = vadd.f32 %v1181, %v1547
      %1549 = vmatmul.f32.gmra.mxu0 %v1236
      %v1550 = vpop.f32.mrf.mxu0
      %v1551 = vadd.f32 %v1181, %v1550
      %1552 = vmatmul.f32.gmra.mxu0 %v1239
      %v1553 = vpop.f32.mrf.mxu0
      %v1554 = vadd.f32 %v1181, %v1553
      %1555 = vmatmul.f32.gmra.mxu0 %v1242
      %v1556 = vpop.f32.mrf.mxu0
      %v1557 = vadd.f32 %v1181, %v1556
      %1558 = vmatmul.f32.gmra.mxu0 %v1245
      %v1559 = vpop.f32.mrf.mxu0
      %v1560 = vadd.f32 %v1181, %v1559
      %1561 = vmatmul.f32.gmra.mxu0 %v1248
      %v1562 = vpop.f32.mrf.mxu0
      %v1563 = vadd.f32 %v1181, %v1562
      %1564 = vmatmul.f32.gmra.mxu0 %v1251
      %v1565 = vpop.f32.mrf.mxu0
      %v1566 = vadd.f32 %v1181, %v1565
      %1567 = vmatmul.f32.gmra.mxu0 %v1254
      %v1568 = vpop.f32.mrf.mxu0
      %v1569 = vadd.f32 %v1181, %v1568
      %1570 = vmatmul.f32.gmra.mxu0 %v1257
      %v1571 = vpop.f32.mrf.mxu0
      %v1572 = vadd.f32 %v1181, %v1571
      %1573 = vmatmul.f32.gmra.mxu0 %v1260
      %v1574 = vpop.f32.mrf.mxu0
      %v1575 = vadd.f32 %v1181, %v1574
      %1576 = vmatmul.f32.gmra.mxu0 %v1263
      %v1577 = vpop.f32.mrf.mxu0
      %v1578 = vadd.f32 %v1181, %v1577
      %1579 = vmatmul.f32.gmra.mxu0 %v1266
      %v1580 = vpop.f32.mrf.mxu0
      %v1581 = vadd.f32 %v1181, %v1580
      %1582 = vmatmul.f32.gmra.mxu0 %v1269
      %v1583 = vpop.f32.mrf.mxu0
      %v1584 = vadd.f32 %v1181, %v1583
      %1585 = vmatmul.f32.gmra.mxu0 %v1272
      %v1586 = vpop.f32.mrf.mxu0
      %v1587 = vadd.f32 %v1181, %v1586
      %1588 = vmatmul.f32.gmra.mxu0 %v1275
      %v1589 = vpop.f32.mrf.mxu0
      %v1590 = vadd.f32 %v1181, %v1589
      %1591 = vmatmul.f32.gmra.mxu0 %v1278
      %v1592 = vpop.f32.mrf.mxu0
      %v1593 = vadd.f32 %v1181, %v1592
      %1594 = vmatmul.f32.gmra.mxu0 %v1483
      %v1595 = vpop.f32.mrf.mxu0
      %v1596 = vadd.f32 %v1181, %v1595
      %1597 = vmatmul.f32.gmra.mxu0 %v1486
      %v1598 = vpop.f32.mrf.mxu0
      %v1599 = vadd.f32 %v1181, %v1598
      %1600 = vdwg.mxu0
      %s1601 = scalar_lea.vmem %s252, 256
      %1602 = vst.msk [vmem:[%s1601] sm:$0xff] %vm1111, %v1506
      %1603 = vst.msk [vmem:[%s1601 + $0x8] sm:$0xff] %vm1111, %v1509
      %1604 = vst.msk [vmem:[%s1601 + $0x10] sm:$0xff] %vm1111, %v1512
      %1605 = vst.msk [vmem:[%s1601 + $0x18] sm:$0xff] %vm1111, %v1515
      %1606 = vst.msk [vmem:[%s1601 + $0x20] sm:$0xff] %vm1111, %v1518
      %1607 = vst.msk [vmem:[%s1601 + $0x28] sm:$0xff] %vm1111, %v1521
      %1608 = vst.msk [vmem:[%s1601 + $0x30] sm:$0xff] %vm1111, %v1524
      %1609 = vst.msk [vmem:[%s1601 + $0x38] sm:$0xff] %vm1111, %v1527
      %1610 = vst.msk [vmem:[%s1601 + $0x40] sm:$0xff] %vm1111, %v1530
      %1611 = vst.msk [vmem:[%s1601 + $0x48] sm:$0xff] %vm1111, %v1533
      %1612 = vst.msk [vmem:[%s1601 + $0x50] sm:$0xff] %vm1111, %v1536
      %1613 = vst.msk [vmem:[%s1601 + $0x58] sm:$0xff] %vm1111, %v1539
      %1614 = vst.msk [vmem:[%s1601 + $0x60] sm:$0xff] %vm1111, %v1542
      %1615 = vst.msk [vmem:[%s1601 + $0x68] sm:$0xff] %vm1111, %v1545
      %1616 = vst.msk [vmem:[%s1601 + $0x70] sm:$0xff] %vm1111, %v1548
      %1617 = vst.msk [vmem:[%s1601 + $0x78] sm:$0xff] %vm1111, %v1551
      %1618 = vst.msk [vmem:[%s1601 + $0x80] sm:$0xff] %vm1111, %v1554
      %1619 = vst.msk [vmem:[%s1601 + $0x88] sm:$0xff] %vm1111, %v1557
      %1620 = vst.msk [vmem:[%s1601 + $0x90] sm:$0xff] %vm1111, %v1560
      %1621 = vst.msk [vmem:[%s1601 + $0x98] sm:$0xff] %vm1111, %v1563
      %1622 = vst.msk [vmem:[%s1601 + $0xa0] sm:$0xff] %vm1111, %v1566
      %1623 = vst.msk [vmem:[%s1601 + $0xa8] sm:$0xff] %vm1111, %v1569
      %1624 = vst.msk [vmem:[%s1601 + $0xb0] sm:$0xff] %vm1111, %v1572
      %1625 = vst.msk [vmem:[%s1601 + $0xb8] sm:$0xff] %vm1111, %v1575
      %1626 = vst.msk [vmem:[%s1601 + $0xc0] sm:$0xff] %vm1111, %v1578
      %1627 = vst.msk [vmem:[%s1601 + $0xc8] sm:$0xff] %vm1111, %v1581
      %1628 = vst.msk [vmem:[%s1601 + $0xd0] sm:$0xff] %vm1111, %v1584
      %1629 = vst.msk [vmem:[%s1601 + $0xd8] sm:$0xff] %vm1111, %v1587
      %1630 = vst.msk [vmem:[%s1601 + $0xe0] sm:$0xff] %vm1111, %v1590
      %1631 = vst.msk [vmem:[%s1601 + $0xe8] sm:$0xff] %vm1111, %v1593
      %1632 = vst.msk [vmem:[%s1601 + $0xf0] sm:$0xff] %vm1111, %v1596
      %1633 = vst.msk [vmem:[%s1601 + $0xf8] sm:$0xff] %vm1111, %v1599
      %s1634 = smul.u32 32, %s21
      %p1635 = scmp.lt.s32.totalorder %s19, 1
      %s1636 = scalar_select %p1635, %s19, 1
      %p1637 = scmp.lt.s32.totalorder %s1634, 31
      %s1638 = scalar_select %p1637, %s1634, 31
      %p1639 = scmp.lt.s32.totalorder %s20, 0
      %s1640 = scalar_select %p1639, %s20, 0
      %s1641 = sadd.s32 %s1640, %s1638
      %s1642 = smul.addr %s1636, 64
      %s1643 = sadd.s32 %s1641, %s1642
      %s1644 = smul.addr %s1643, 8
      %s1645 = scalar_lea.vmem %s3, %s1644
      // Predicated region
      $region33: #{upsample_forward.1} parent=31 // pred_check
        %p1646 = pneg %p135
      $region34: #{upsample_forward.1} parent=31 // pred_check_branch
        %1648 = sbr.rel (%p1646) target = $region36
      $region35: #{upsample_forward.1} parent=31 // pred_region
        %s1649 = smul.u32 32, %s21
      $region36: #{upsample_forward.1} parent=31 // pred_fallthru
        _
    $region32: #{upsample_forward.1} parent=5 // pred_fallthru
      _
    %p1650 = scmp.le.s32.totalorder 2, %s9
    // Predicated region
    $region37: #{upsample_forward.1} parent=5 // pred_check
      %p1651 = pneg %p1650
    $region38: #{upsample_forward.1} parent=5 // pred_check_branch
      %1653 = sbr.rel (%p1651) target = $region40
    $region39: #{upsample_forward.1} parent=5 // pred_region
      %s1654 = ssub.s32 %s9, 2
      // Predicated region
      $region41: #{upsample_forward.1} parent=39 // pred_check
        %p1655 = pneg %p141
      $region42: #{upsample_forward.1} parent=39 // pred_check_branch
        %1657 = sbr.rel (%p1655) target = $region44
      $region43: #{upsample_forward.1} parent=39 // pred_region
        %s1658 = smul.u32 32, %s24
        %p1659 = scmp.lt.s32.totalorder %s22, 1
        %s1660 = scalar_select %p1659, %s22, 1
        %p1661 = scmp.lt.s32.totalorder %s1658, 31
        %s1662 = scalar_select %p1661, %s1658, 31
        %p1663 = scmp.lt.s32.totalorder %s23, 0
        %s1664 = scalar_select %p1663, %s23, 0
        %s1665 = sadd.s32 %s1664, %s1662
        %s1666 = smul.addr %s1660, 64
        %s1667 = sadd.s32 %s1665, %s1666
        %s1668 = smul.addr %s1667, 8
        %s1669 = scalar_lea.vmem %s3, %s1668
      $region44: #{upsample_forward.1} parent=39 // pred_fallthru
        _
    $region40: #{upsample_forward.1} parent=5 // pred_fallthru
      _
  $region6: #{upsample_forward.1} parent=0 // loop_footer
    %s13 = sadd.s32 1, %s9
  $region7: #{upsample_forward.1} parent=0 // loop_footer_branch
    %8 = sbr.rel target = $region3
  $region8: #{upsample_forward.1} parent=0 // loop_exit
    _

</llo_original>
